<compile_context>
chip_gen: v7x
topology: tpu7x:2x2x1
jax: 0.10.0
libtpu: 0.0.40
codegen_flags: <defaults>
</compile_context>

<pallas_src>
import functools

import jax
import jax.numpy as jnp
from jax.experimental import pallas as pl
from jax.experimental.pallas import tpu as pltpu

D_IN, D_HID, D_OUT = 784, 197, 10          # module dims (fixed by the spec)
D_HID_P, D_OUT_P = 256, 128                # MXU/lane-aligned padded dims
NEG_BIG = -1e9                             # padded-logit bias -> exp() == 0


def mlp_kernel(x_ref, w1_ref, b1_ref, w2_ref, b2_ref, o_ref):
    # f32 x tile was DMA'd directly from HBM; cast to bf16 on the VPU here
    # (avoids a separate XLA cast op and an extra full HBM pass over x).
    xb = x_ref[...].astype(jnp.bfloat16)

    # hidden pre-activation: bf16 operands on the MXU, f32 accumulation
    h = jnp.dot(xb, w1_ref[...], preferred_element_type=jnp.float32)
    h = h + b1_ref[...]                                   # (TB,256) + (1,256)
    # sigmoid as one EUP push per vreg: sigmoid(h) = 0.5 * tanh(0.5*h) + 0.5
    h = 0.5 * jnp.tanh(0.5 * h) + 0.5

    # logits: bf16 hidden @ bf16 W2, f32 accumulation
    logits = jnp.dot(h.astype(jnp.bfloat16), w2_ref[...],
                     preferred_element_type=jnp.float32)
    logits = logits + b2_ref[...]                         # (TB,128) + (1,128)

    # numerically-stable softmax over the (padded) feature axis.
    # Padded lanes carry a -1e9 bias -> exp underflows to exactly 0, so the
    # first 10 probabilities equal the true 10-class softmax.
    m = jnp.max(logits, axis=1, keepdims=True)
    e = jnp.exp(logits - m)
    denom = jnp.sum(e, axis=1, keepdims=True)
    o_ref[...] = (e * pl.reciprocal(denom, approx=True)).astype(o_ref.dtype)


def _round_up(n, m):
    return ((n + m - 1) // m) * m


def prepare_params(w1, b1, w2, b2):
    """One-time padding/casting of the parameters (hoisted out of the forward).

    Hidden lanes 197..255: W1 cols and b1 are zero -> sigmoid(0)=0.5, but the
    matching W2 rows are zero so they add nothing to the logits (exact).
    Output lanes 10..127: W2 cols are zero, bias is -1e9 -> softmax weight 0.
    """
    w1p = jnp.zeros((D_IN, D_HID_P), jnp.bfloat16)
    w1p = w1p.at[:, :D_HID].set(w1.astype(jnp.bfloat16))
    b1p = jnp.zeros((1, D_HID_P), jnp.float32)
    b1p = b1p.at[:, :D_HID].set(b1.reshape(1, -1).astype(jnp.float32))
    w2p = jnp.zeros((D_HID_P, D_OUT_P), jnp.bfloat16)
    w2p = w2p.at[:D_HID, :D_OUT].set(w2.astype(jnp.bfloat16))
    b2p = jnp.full((1, D_OUT_P), NEG_BIG, jnp.float32)
    b2p = b2p.at[:, :D_OUT].set(b2.reshape(1, -1).astype(jnp.float32))
    return w1p, b1p, w2p, b2p


def _auto_tile(batch):
    # Aim for ~4 grid steps (>=2 pipelined steps per TC on v7x megacore),
    # rows per tile a multiple of 8, capped at 512 (v6e/v5e roofline sweet spot).
    t = _round_up(pl.cdiv(batch, 4), 8)
    return max(8, min(512, t))


@functools.partial(jax.jit, static_argnames=("tile_b",))
def network_forward(x, w1p, b1p, w2p, b2p, *, tile_b=None):
    """x: (B, 784) float32. w*p/b*p: padded params from prepare_params.
    Returns softmax probabilities (B, 10) float32."""
    B = x.shape[0]
    if tile_b is None:
        tile_b = _auto_tile(B)
    tile_b = max(8, min(_round_up(tile_b, 8), _round_up(B, 8)))

    # Ragged last block (B not a multiple of tile_b) is handled by Pallas:
    # padded rows are masked on writeback and sliced off below.
    grid = (pl.cdiv(B, tile_b),)

    out = pl.pallas_call(
        mlp_kernel,
        out_shape=jax.ShapeDtypeStruct((B, D_OUT_P), jnp.bfloat16),
        grid_spec=pltpu.PrefetchScalarGridSpec(
            num_scalar_prefetch=0,
            grid=grid,
            in_specs=[
                pl.BlockSpec((tile_b, D_IN), lambda i: (i, 0)),      # x tile (f32)
                pl.BlockSpec((D_IN, D_HID_P), lambda i: (0, 0)),     # W1 (resident)
                pl.BlockSpec((1, D_HID_P), lambda i: (0, 0)),        # b1
                pl.BlockSpec((D_HID_P, D_OUT_P), lambda i: (0, 0)),  # W2 (resident)
                pl.BlockSpec((1, D_OUT_P), lambda i: (0, 0)),        # b2
            ],
            out_specs=pl.BlockSpec((tile_b, D_OUT_P), lambda i: (i, 0)),
        ),
        compiler_params=pltpu.CompilerParams(
            dimension_semantics=("parallel",),          # shard batch across TCs
            vmem_limit_bytes=32 * 1024 * 1024,          # safe on v5e/v6e/v7x
        ),
    )(x, w1p, b1p, w2p, b2p)

    return out[:, :D_OUT].astype(jnp.float32)


def init_params(key):
    # Mimic PyTorch nn.Linear default init: U(-1/sqrt(fan_in), 1/sqrt(fan_in)).
    # Weights stored (in, out) == torch weight (out, in) transposed.
    k1, k2, k3, k4 = jax.random.split(key, 4)
    bound1 = 1.0 / jnp.sqrt(784.0)
    bound2 = 1.0 / jnp.sqrt(197.0)
    w1 = jax.random.uniform(k1, (784, 197), jnp.float32, -bound1, bound1)
    b1 = jax.random.uniform(k2, (197,), jnp.float32, -bound1, bound1)
    w2 = jax.random.uniform(k3, (197, 10), jnp.float32, -bound2, bound2)
    b2 = jax.random.uniform(k4, (10,), jnp.float32, -bound2, bound2)
    return w1, b1, w2, b2


if __name__ == "__main__":
    key = jax.random.PRNGKey(0)
    k_x, k_p = jax.random.split(key)

    B = 512  # auto tile -> tile_b=128, grid=(4,): >=2 pipelined steps per TC
    x = jax.random.normal(k_x, (B, 784), jnp.float32)
    w1, b1, w2, b2 = init_params(k_p)

    # Parameter padding / bf16 cast happens ONCE, outside the forward path.
    w1p, b1p, w2p, b2p = prepare_params(w1, b1, w2, b2)

    out = network_forward(x, w1p, b1p, w2p, b2p)
    out = jax.block_until_ready(out)

    # Pure-JAX reference with the same bf16 MXU operands / f32 accumulation.
    xb = x.astype(jnp.bfloat16)
    h_ref = jax.nn.sigmoid(
        jnp.dot(xb, w1.astype(jnp.bfloat16),
                preferred_element_type=jnp.float32) + b1)
    logits_ref = jnp.dot(h_ref.astype(jnp.bfloat16), w2.astype(jnp.bfloat16),
                         preferred_element_type=jnp.float32) + b2
    ref = jax.nn.softmax(logits_ref, axis=1)

    assert out.shape == (B, 10)
    assert jnp.allclose(out, ref, atol=2e-2, rtol=2e-2)
    assert jnp.allclose(jnp.sum(out, axis=1), 1.0, atol=2e-2)

    print("KERNEL_OK")
</pallas_src>

<mosaic_0001>
module attributes {stable_mosaic.version = 11 : i64} {
  func.func @mlp_kernel(%arg0: i32, %arg1: memref<128x784xf32, #tpu.memory_space<vmem>>, %arg2: memref<784x256xbf16, #tpu.memory_space<vmem>>, %arg3: memref<1x256xf32, #tpu.memory_space<vmem>>, %arg4: memref<256x128xbf16, #tpu.memory_space<vmem>>, %arg5: memref<1x128xf32, #tpu.memory_space<vmem>>, %arg6: memref<128x128xbf16, #tpu.memory_space<vmem>>) attributes {dimension_semantics = [#tpu.dimension_semantics<parallel>], iteration_bounds = array<i64: 4>, scalar_prefetch = 0 : i64, scratch_operands = 0 : i64, tpu.core_type = #tpu.core_type<tc>, window_params = [{transform_indices = @transform_0, window_bounds = array<i64: 128, 784>}, {pipeline_mode = #tpu.pipeline_mode<synchronous>, transform_indices = @transform_1, window_bounds = array<i64: 784, 256>}, {pipeline_mode = #tpu.pipeline_mode<synchronous>, transform_indices = @transform_2, window_bounds = array<i64: 1, 256>}, {pipeline_mode = #tpu.pipeline_mode<synchronous>, transform_indices = @transform_3, window_bounds = array<i64: 256, 128>}, {pipeline_mode = #tpu.pipeline_mode<synchronous>, transform_indices = @transform_4, window_bounds = array<i64: 1, 128>}, {transform_indices = @transform_5, window_bounds = array<i64: 128, 128>}]} {
    %c0 = arith.constant 0 : index
    %c0_0 = arith.constant 0 : index
    %0 = vector.load %arg1[%c0, %c0_0] : memref<128x784xf32, #tpu.memory_space<vmem>>, vector<128x784xf32>
    %1 = arith.truncf %0 : vector<128x784xf32> to vector<128x784xbf16>
    %c0_1 = arith.constant 0 : index
    %c0_2 = arith.constant 0 : index
    %2 = vector.load %arg2[%c0_1, %c0_2] : memref<784x256xbf16, #tpu.memory_space<vmem>>, vector<784x256xbf16>
    %cst = arith.constant dense<0.000000e+00> : vector<128x256xf32>
    %3 = tpu.matmul %1, %2, %cst {dimension_numbers = #tpu.dot_dimension_numbers<[1], [0], [0], [1], [0, 0, 1, 1], [], []>} : vector<128x784xbf16>, vector<784x256xbf16>, vector<128x256xf32> -> vector<128x256xf32>
    %c0_3 = arith.constant 0 : index
    %c0_4 = arith.constant 0 : index
    %4 = vector.load %arg3[%c0_3, %c0_4] : memref<1x256xf32, #tpu.memory_space<vmem>>, vector<1x256xf32>
    %5 = vector.broadcast %4 : vector<1x256xf32> to vector<128x256xf32>
    %6 = arith.addf %3, %5 : vector<128x256xf32>
    %cst_5 = arith.constant 5.000000e-01 : f32
    %7 = vector.broadcast %cst_5 : f32 to vector<128x256xf32>
    %8 = arith.mulf %7, %6 : vector<128x256xf32>
    %9 = math.tanh %8 : vector<128x256xf32>
    %cst_6 = arith.constant 5.000000e-01 : f32
    %10 = vector.broadcast %cst_6 : f32 to vector<128x256xf32>
    %11 = arith.mulf %10, %9 : vector<128x256xf32>
    %cst_7 = arith.constant 5.000000e-01 : f32
    %12 = vector.broadcast %cst_7 : f32 to vector<128x256xf32>
    %13 = arith.addf %11, %12 : vector<128x256xf32>
    %14 = arith.truncf %13 : vector<128x256xf32> to vector<128x256xbf16>
    %c0_8 = arith.constant 0 : index
    %c0_9 = arith.constant 0 : index
    %15 = vector.load %arg4[%c0_8, %c0_9] : memref<256x128xbf16, #tpu.memory_space<vmem>>, vector<256x128xbf16>
    %cst_10 = arith.constant dense<0.000000e+00> : vector<128x128xf32>
    %16 = tpu.matmul %14, %15, %cst_10 {dimension_numbers = #tpu.dot_dimension_numbers<[1], [0], [0], [1], [0, 0, 1, 1], [], []>} : vector<128x256xbf16>, vector<256x128xbf16>, vector<128x128xf32> -> vector<128x128xf32>
    %c0_11 = arith.constant 0 : index
    %c0_12 = arith.constant 0 : index
    %17 = vector.load %arg5[%c0_11, %c0_12] : memref<1x128xf32, #tpu.memory_space<vmem>>, vector<1x128xf32>
    %18 = vector.broadcast %17 : vector<1x128xf32> to vector<128x128xf32>
    %19 = arith.addf %16, %18 : vector<128x128xf32>
    %cst_13 = arith.constant dense<0xFF800000> : vector<128xf32>
    %20 = vector.multi_reduction <maximumf>, %19, %cst_13 [1] : vector<128x128xf32> to vector<128xf32>
    %21 = vector.shape_cast %20 : vector<128xf32> to vector<128x1xf32>
    %22 = vector.broadcast %21 : vector<128x1xf32> to vector<128x128xf32>
    %23 = arith.subf %19, %22 : vector<128x128xf32>
    %24 = math.exp %23 : vector<128x128xf32>
    %cst_14 = arith.constant dense<0.000000e+00> : vector<128xf32>
    %25 = vector.multi_reduction <add>, %24, %cst_14 [1] : vector<128x128xf32> to vector<128xf32>
    %26 = vector.shape_cast %25 : vector<128xf32> to vector<128x1xf32>
    %27 = tpu.reciprocal %26 {approx = true} : vector<128x1xf32> -> vector<128x1xf32>
    %28 = vector.broadcast %27 : vector<128x1xf32> to vector<128x128xf32>
    %29 = arith.mulf %24, %28 : vector<128x128xf32>
    %30 = arith.truncf %29 : vector<128x128xf32> to vector<128x128xbf16>
    %c0_15 = arith.constant 0 : index
    %c0_16 = arith.constant 0 : index
    %31 = vector.load %arg6[%c0_15, %c0_16] : memref<128x128xbf16, #tpu.memory_space<vmem>>, vector<128x128xbf16>
    tpu.vector_store %arg6[%c0_15, %c0_16], %30 {strides = array<i32>} : memref<128x128xbf16, #tpu.memory_space<vmem>>, vector<128x128xbf16>,
    return
  }
  func.func @transform_0(%arg0: i32) -> (i32, i32) {
    %c0_i32 = arith.constant 0 : i32
    %c0_i32_0 = arith.constant 0 : i32
    return %arg0, %c0_i32 : i32, i32
  }
  func.func @transform_1(%arg0: i32) -> (i32, i32) {
    %c0_i32 = arith.constant 0 : i32
    %c0_i32_0 = arith.constant 0 : i32
    %c0_i32_1 = arith.constant 0 : i32
    return %c0_i32, %c0_i32_0 : i32, i32
  }
  func.func @transform_2(%arg0: i32) -> (i32, i32) {
    %c0_i32 = arith.constant 0 : i32
    %c0_i32_0 = arith.constant 0 : i32
    %c0_i32_1 = arith.constant 0 : i32
    return %c0_i32, %c0_i32_0 : i32, i32
  }
  func.func @transform_3(%arg0: i32) -> (i32, i32) {
    %c0_i32 = arith.constant 0 : i32
    %c0_i32_0 = arith.constant 0 : i32
    %c0_i32_1 = arith.constant 0 : i32
    return %c0_i32, %c0_i32_0 : i32, i32
  }
  func.func @transform_4(%arg0: i32) -> (i32, i32) {
    %c0_i32 = arith.constant 0 : i32
    %c0_i32_0 = arith.constant 0 : i32
    %c0_i32_1 = arith.constant 0 : i32
    return %c0_i32, %c0_i32_0 : i32, i32
  }
  func.func @transform_5(%arg0: i32) -> (i32, i32) {
    %c0_i32 = arith.constant 0 : i32
    %c0_i32_0 = arith.constant 0 : i32
    return %arg0, %c0_i32 : i32, i32
  }
}

</mosaic_0001>

<llo_original>
// kernel: network_forward.1
$region0: #{network_forward.1}
  #allocation0 [shape = 'u32[]', space=smem, size = 0x4, offset = 0x4, fixed_abs, tag = 'smem constant byte address 0x4 - core index']
  #allocation1 [shape = 'u32[144,128]{1,0:T(1,128)}', space=vmem, size = 0x12000, scoped, tag = 'internal scratch']
  %s0 = inlined_call_operand.vmem [shape: f32[512,784], index: 0, kind: input, shape index: {}]
  %s1 = inlined_call_operand.vmem [shape: bf16[784,256], index: 1, kind: input, shape index: {}]
  %s2 = inlined_call_operand.vmem [shape: f32[1,256], index: 2, kind: input, shape index: {}]
  %s3 = inlined_call_operand.vmem [shape: bf16[256,128], index: 3, kind: input, shape index: {}]
  %s4 = inlined_call_operand.vmem [shape: f32[1,128], index: 4, kind: input, shape index: {}]
  %s5 = inlined_call_operand.vmem [shape: bf16[512,128], index: 5, kind: output, shape index: {}]
  %s6 = sld [smem:[#allocation0]]
  $region53: #{network_forward.1} parent=0
    _
  %s8 = ssub.s32 1, %s6
  %s9 = scalar_select 0, %s8, %s6
  loop: start=0, step=1, limit=6
  $region2: #{network_forward.1} parent=0 // loop_pre_header
    _
  $region3: #{network_forward.1} parent=0 // loop_header
    %s11 = sphi 0, %s15
    %p12 = scmp.ge.s32.totalorder %s11, 6
    %s21 = sphi 0, %s23
    %s24 = sphi 0, %s21
    %s25 = sphi 0, %s24
    %s41 = sphi 0, %s25
    %s45 = sphi 0, %s45
    %s47 = sphi 0, %s45
    %s48 = sphi 0, %s47
    %s62 = sphi 0, %s48
    %s66 = sphi 0, %s66
    %s68 = sphi 0, %s66
    %s69 = sphi 0, %s68
    %s83 = sphi 0, %s69
    %s87 = sphi 0, %s87
    %s89 = sphi 0, %s87
    %s90 = sphi 0, %s89
    %s104 = sphi 0, %s90
    %s108 = sphi 0, %s108
    %s110 = sphi 0, %s108
    %s111 = sphi 0, %s110
    %s125 = sphi 0, %s111
    %s131 = sphi 0, %s133
    %s134 = sphi 0, %s131
    %s135 = sphi 0, %s134
    %s151 = sphi 0, %s135
  $region4: #{network_forward.1} parent=0 // loop_header_branch
    %14 = sbr.rel (%p12) target = $region8
  $region5: #{network_forward.1} parent=0 // loop_body
    %s16 = ssub.s32 %s11, 1
    %s17 = ssub.s32 %s11, 2
    %s18 = sadd.s32 %s11, 1
    %s19 = ssub.s32 %s11, %s18
    %p20 = scmp.eq.s32.totalorder %s19, 0
    %s22 = sadd.s32 %s21, 1
    %s23 = scalar_select %p20, %s21, %s22
    %p26 = pneg %p20
    %p27 = scmp.eq.s32.totalorder %s11, 3
    %p28 = por %p26, %p27
    %p29 = scmp.ne.s32.totalorder %s21, %s24
    %p30 = scmp.eq.s32.totalorder %s11, 0
    %p31 = por %p29, %p30
    %p32 = scmp.ne.s32.totalorder %s21, %s24
    %p33 = scmp.eq.s32.totalorder %s16, 3
    %p34 = por %p32, %p33
    %p35 = scmp.ne.s32.totalorder %s24, %s25
    %p36 = scmp.eq.s32.totalorder %s16, 0
    %p37 = por %p35, %p36
    %p38 = scmp.ne.s32.totalorder %s24, %s25
    %p39 = scmp.eq.s32.totalorder %s17, 3
    %p40 = por %p38, %p39
    %p42 = scmp.ne.s32.totalorder %s25, %s41
    %p43 = scmp.eq.s32.totalorder %s17, 0
    %p44 = por %p42, %p43
    %s46 = sadd.s32 %s45, 1
    %p49 = scmp.eq.s32.totalorder %s11, 3
    %p50 = scmp.ne.s32.totalorder %s45, %s47
    %p51 = scmp.eq.s32.totalorder %s11, 0
    %p52 = por %p50, %p51
    %p53 = scmp.ne.s32.totalorder %s45, %s47
    %p54 = scmp.eq.s32.totalorder %s16, 3
    %p55 = por %p53, %p54
    %p56 = scmp.ne.s32.totalorder %s47, %s48
    %p57 = scmp.eq.s32.totalorder %s16, 0
    %p58 = por %p56, %p57
    %p59 = scmp.ne.s32.totalorder %s47, %s48
    %p60 = scmp.eq.s32.totalorder %s17, 3
    %p61 = por %p59, %p60
    %p63 = scmp.ne.s32.totalorder %s48, %s62
    %p64 = scmp.eq.s32.totalorder %s17, 0
    %p65 = por %p63, %p64
    %s67 = sadd.s32 %s66, 1
    %p70 = scmp.eq.s32.totalorder %s11, 3
    %p71 = scmp.ne.s32.totalorder %s66, %s68
    %p72 = scmp.eq.s32.totalorder %s11, 0
    %p73 = por %p71, %p72
    %p74 = scmp.ne.s32.totalorder %s66, %s68
    %p75 = scmp.eq.s32.totalorder %s16, 3
    %p76 = por %p74, %p75
    %p77 = scmp.ne.s32.totalorder %s68, %s69
    %p78 = scmp.eq.s32.totalorder %s16, 0
    %p79 = por %p77, %p78
    %p80 = scmp.ne.s32.totalorder %s68, %s69
    %p81 = scmp.eq.s32.totalorder %s17, 3
    %p82 = por %p80, %p81
    %p84 = scmp.ne.s32.totalorder %s69, %s83
    %p85 = scmp.eq.s32.totalorder %s17, 0
    %p86 = por %p84, %p85
    %s88 = sadd.s32 %s87, 1
    %p91 = scmp.eq.s32.totalorder %s11, 3
    %p92 = scmp.ne.s32.totalorder %s87, %s89
    %p93 = scmp.eq.s32.totalorder %s11, 0
    %p94 = por %p92, %p93
    %p95 = scmp.ne.s32.totalorder %s87, %s89
    %p96 = scmp.eq.s32.totalorder %s16, 3
    %p97 = por %p95, %p96
    %p98 = scmp.ne.s32.totalorder %s89, %s90
    %p99 = scmp.eq.s32.totalorder %s16, 0
    %p100 = por %p98, %p99
    %p101 = scmp.ne.s32.totalorder %s89, %s90
    %p102 = scmp.eq.s32.totalorder %s17, 3
    %p103 = por %p101, %p102
    %p105 = scmp.ne.s32.totalorder %s90, %s104
    %p106 = scmp.eq.s32.totalorder %s17, 0
    %p107 = por %p105, %p106
    %s109 = sadd.s32 %s108, 1
    %p112 = scmp.eq.s32.totalorder %s11, 3
    %p113 = scmp.ne.s32.totalorder %s108, %s110
    %p114 = scmp.eq.s32.totalorder %s11, 0
    %p115 = por %p113, %p114
    %p116 = scmp.ne.s32.totalorder %s108, %s110
    %p117 = scmp.eq.s32.totalorder %s16, 3
    %p118 = por %p116, %p117
    %p119 = scmp.ne.s32.totalorder %s110, %s111
    %p120 = scmp.eq.s32.totalorder %s16, 0
    %p121 = por %p119, %p120
    %p122 = scmp.ne.s32.totalorder %s110, %s111
    %p123 = scmp.eq.s32.totalorder %s17, 3
    %p124 = por %p122, %p123
    %p126 = scmp.ne.s32.totalorder %s111, %s125
    %p127 = scmp.eq.s32.totalorder %s17, 0
    %p128 = por %p126, %p127
    %s129 = ssub.s32 %s11, %s18
    %p130 = scmp.eq.s32.totalorder %s129, 0
    %s132 = sadd.s32 %s131, 1
    %s133 = scalar_select %p130, %s131, %s132
    %p136 = pneg %p130
    %p137 = scmp.eq.s32.totalorder %s11, 3
    %p138 = por %p136, %p137
    %p139 = scmp.ne.s32.totalorder %s131, %s134
    %p140 = scmp.eq.s32.totalorder %s11, 0
    %p141 = por %p139, %p140
    %p142 = scmp.ne.s32.totalorder %s131, %s134
    %p143 = scmp.eq.s32.totalorder %s16, 3
    %p144 = por %p142, %p143
    %p145 = scmp.ne.s32.totalorder %s134, %s135
    %p146 = scmp.eq.s32.totalorder %s16, 0
    %p147 = por %p145, %p146
    %p148 = scmp.ne.s32.totalorder %s134, %s135
    %p149 = scmp.eq.s32.totalorder %s17, 3
    %p150 = por %p148, %p149
    %p152 = scmp.ne.s32.totalorder %s135, %s151
    %p153 = scmp.eq.s32.totalorder %s17, 0
    %p154 = por %p152, %p153
    %p155 = scmp.le.s32.totalorder 1, %s11
    %p156 = scmp.lt.s32.totalorder %s11, 5
    %p157 = pnand %p155, %p156
    %p158 = pneg %p157
    // Predicated region
    $region9: #{network_forward.1} parent=5 // pred_check
      _
    $region10: #{network_forward.1} parent=5 // pred_check_branch
      %160 = sbr.rel (%p157) target = $region12
    $region11: #{network_forward.1} parent=5 // pred_region
      %s161 = ssub.s32 %s11, 1
      // Predicated region
      $region13: #{network_forward.1} parent=11 // pred_check
        %p162 = pneg %p58
      $region14: #{network_forward.1} parent=11 // pred_check_branch
        %164 = sbr.rel (%p162) target = $region16
      $region15: #{network_forward.1} parent=11 // pred_region
        _
      $region16: #{network_forward.1} parent=11 // pred_fallthru
        _
      // Predicated region
      $region17: #{network_forward.1} parent=11 // pred_check
        %p165 = pneg %p79
      $region18: #{network_forward.1} parent=11 // pred_check_branch
        %167 = sbr.rel (%p165) target = $region20
      $region19: #{network_forward.1} parent=11 // pred_region
        _
      $region20: #{network_forward.1} parent=11 // pred_fallthru
        _
      // Predicated region
      $region21: #{network_forward.1} parent=11 // pred_check
        %p168 = pneg %p100
      $region22: #{network_forward.1} parent=11 // pred_check_branch
        %170 = sbr.rel (%p168) target = $region24
      $region23: #{network_forward.1} parent=11 // pred_region
        _
      $region24: #{network_forward.1} parent=11 // pred_fallthru
        _
      // Predicated region
      $region25: #{network_forward.1} parent=11 // pred_check
        %p171 = pneg %p121
      $region26: #{network_forward.1} parent=11 // pred_check_branch
        %173 = sbr.rel (%p171) target = $region28
      $region27: #{network_forward.1} parent=11 // pred_region
        _
      $region28: #{network_forward.1} parent=11 // pred_fallthru
        _
    $region12: #{network_forward.1} parent=5 // pred_fallthru
      _
    %p174 = scmp.lt.s32.totalorder %s11, 4
    // Predicated region
    $region29: #{network_forward.1} parent=5 // pred_check
      %p175 = pneg %p174
    $region30: #{network_forward.1} parent=5 // pred_check_branch
      %177 = sbr.rel (%p175) target = $region32
    $region31: #{network_forward.1} parent=5 // pred_region
      // Predicated region
      $region33: #{network_forward.1} parent=31 // pred_check
        %p178 = pneg %p31
      $region34: #{network_forward.1} parent=31 // pred_check_branch
        %180 = sbr.rel (%p178) target = $region36
      $region35: #{network_forward.1} parent=31 // pred_region
        %s181 = smul.u32 16, %s11
        %p182 = scmp.lt.s32.totalorder %s181, 63
        %s183 = scalar_select %p182, %s181, 63
        %s184 = smul.addr %s183, 7
        %s185 = smul.addr %s184, 8
        %s186 = scalar_lea.vmem %s0, %s185
        %s187 = smul.u32 16, %s11
      $region36: #{network_forward.1} parent=31 // pred_fallthru
        _
    $region32: #{network_forward.1} parent=5 // pred_fallthru
      _
    %p188 = scmp.le.s32.totalorder 1, %s11
    %p189 = scmp.lt.s32.totalorder %s11, 5
    %p190 = pnand %p188, %p189
    %p191 = pneg %p190
    // Predicated region
    $region37: #{network_forward.1} parent=5 // pred_check
      _
    $region38: #{network_forward.1} parent=5 // pred_check_branch
      %193 = sbr.rel (%p190) target = $region40
    $region39: #{network_forward.1} parent=5 // pred_region
      %s194 = ssub.s32 %s11, 1
      %s195 = smul.u32 16, %s16
      %p196 = scmp.lt.s32.totalorder %s195, 63
      %s197 = scalar_select %p196, %s195, 63
      %s198 = smul.addr %s197, 7
      %s199 = smul.addr %s198, 8
      %s200 = scalar_lea.vmem %s0, %s199
      %p201 = pneg %p37
      %p202 = pneg %p34
      %p203 = pneg %p58
      %p204 = pneg %p55
      %p205 = pneg %p79
      %p206 = pneg %p76
      %p207 = pneg %p100
      %p208 = pneg %p97
      %p209 = pneg %p121
      %p210 = pneg %p118
      %p211 = pneg %p147
      %p212 = pneg %p144
      %s213 = smul.u32 16, %s16
      %p214 = scmp.lt.s32.totalorder %s213, 63
      %s215 = scalar_select %p214, %s213, 63
      %s216 = smul.addr %s215, 4
      %s217 = scalar_lea.vmem %s5, %s216
      %s218 = smul.u32 16, %s16
      %p219 = scmp.lt.s32.totalorder %s218, 63
      %s220 = scalar_select %p219, %s218, 63
      %s221 = smul.addr %s220, 7
      %s222 = smul.addr %s221, 8
      %s223 = scalar_lea.vmem %s0, %s222
      %s224 = smul.u32 16, %s16
      %s225 = smul.u32 16, %s16
      %p226 = scmp.lt.s32.totalorder %s225, 63
      %s227 = scalar_select %p226, %s225, 63
      %s228 = smul.addr %s227, 4
      %s229 = scalar_lea.vmem %s5, %s228
      %s230 = smul.u32 16, %s16
      %v232 = vld [vmem:[%s223] sm:$0xff]
      %v233 = vld [vmem:[%s223 + $0x8] sm:$0xff]
      %v234 = vld [vmem:[%s223 + $0x10] sm:$0xff]
      %v235 = vld [vmem:[%s223 + $0x18] sm:$0xff]
      %v236 = vld [vmem:[%s223 + $0x20] sm:$0xff]
      %v237 = vld [vmem:[%s223 + $0x28] sm:$0xff]
      %v238 = vld [vmem:[%s223 + $0x30] sm:$0xff]
      %v239 = vld [vmem:[%s223 + $0x38] sm:$0xff]
      %v240 = vld [vmem:[%s223 + $0x40] sm:$0xff]
      %v241 = vld [vmem:[%s223 + $0x48] sm:$0xff]
      %v242 = vld [vmem:[%s223 + $0x50] sm:$0xff]
      %v243 = vld [vmem:[%s223 + $0x58] sm:$0xff]
      %v244 = vld [vmem:[%s223 + $0x60] sm:$0xff]
      %v245 = vld [vmem:[%s223 + $0x68] sm:$0xff]
      %v246 = vld [vmem:[%s223 + $0x70] sm:$0xff]
      %v247 = vld [vmem:[%s223 + $0x78] sm:$0xff]
      %v248 = vld [vmem:[%s223 + $0x80] sm:$0xff]
      %v249 = vld [vmem:[%s223 + $0x88] sm:$0xff]
      %v250 = vld [vmem:[%s223 + $0x90] sm:$0xff]
      %v251 = vld [vmem:[%s223 + $0x98] sm:$0xff]
      %v252 = vld [vmem:[%s223 + $0xa0] sm:$0xff]
      %v253 = vld [vmem:[%s223 + $0xa8] sm:$0xff]
      %v254 = vld [vmem:[%s223 + $0xb0] sm:$0xff]
      %v255 = vld [vmem:[%s223 + $0xb8] sm:$0xff]
      %v256 = vld [vmem:[%s223 + $0xc0] sm:$0xff]
      %v257 = vld [vmem:[%s223 + $0xc8] sm:$0xff]
      %v258 = vld [vmem:[%s223 + $0xd0] sm:$0xff]
      %v259 = vld [vmem:[%s223 + $0xd8] sm:$0xff]
      %v260 = vld [vmem:[%s223 + $0xe0] sm:$0xff]
      %v261 = vld [vmem:[%s223 + $0xe8] sm:$0xff]
      %v262 = vld [vmem:[%s223 + $0xf0] sm:$0xff]
      %v263 = vld [vmem:[%s223 + $0xf8] sm:$0xff]
      %v264 = vld [vmem:[%s223 + $0x100] sm:$0xff]
      %v265 = vld [vmem:[%s223 + $0x108] sm:$0xff]
      %v266 = vld [vmem:[%s223 + $0x110] sm:$0xff]
      %v267 = vld [vmem:[%s223 + $0x118] sm:$0xff]
      %v268 = vld [vmem:[%s223 + $0x120] sm:$0xff]
      %v269 = vld [vmem:[%s223 + $0x128] sm:$0xff]
      %v270 = vld [vmem:[%s223 + $0x130] sm:$0xff]
      %v271 = vld [vmem:[%s223 + $0x138] sm:$0xff]
      %v272 = vld [vmem:[%s223 + $0x140] sm:$0xff]
      %v273 = vld [vmem:[%s223 + $0x148] sm:$0xff]
      %v274 = vld [vmem:[%s223 + $0x150] sm:$0xff]
      %v275 = vld [vmem:[%s223 + $0x158] sm:$0xff]
      %v276 = vld [vmem:[%s223 + $0x160] sm:$0xff]
      %v277 = vld [vmem:[%s223 + $0x168] sm:$0xff]
      %v278 = vld [vmem:[%s223 + $0x170] sm:$0xff]
      %v279 = vld [vmem:[%s223 + $0x178] sm:$0xff]
      %v280 = vld [vmem:[%s223 + $0x180] sm:$0xff]
      %v281 = vld [vmem:[%s223 + $0x188] sm:$0xff]
      %v282 = vld [vmem:[%s223 + $0x190] sm:$0xff]
      %v283 = vld [vmem:[%s223 + $0x198] sm:$0xff]
      %v284 = vld [vmem:[%s223 + $0x1a0] sm:$0xff]
      %v285 = vld [vmem:[%s223 + $0x1a8] sm:$0xff]
      %v286 = vld [vmem:[%s223 + $0x1b0] sm:$0xff]
      %v287 = vld [vmem:[%s223 + $0x1b8] sm:$0xff]
      %v288 = vld [vmem:[%s223 + $0x1c0] sm:$0xff]
      %v289 = vld [vmem:[%s223 + $0x1c8] sm:$0xff]
      %v290 = vld [vmem:[%s223 + $0x1d0] sm:$0xff]
      %v291 = vld [vmem:[%s223 + $0x1d8] sm:$0xff]
      %v292 = vld [vmem:[%s223 + $0x1e0] sm:$0xff]
      %v293 = vld [vmem:[%s223 + $0x1e8] sm:$0xff]
      %v294 = vld [vmem:[%s223 + $0x1f0] sm:$0xff]
      %v295 = vld [vmem:[%s223 + $0x1f8] sm:$0xff]
      %v296 = vld [vmem:[%s223 + $0x200] sm:$0xff]
      %v297 = vld [vmem:[%s223 + $0x208] sm:$0xff]
      %v298 = vld [vmem:[%s223 + $0x210] sm:$0xff]
      %v299 = vld [vmem:[%s223 + $0x218] sm:$0xff]
      %v300 = vld [vmem:[%s223 + $0x220] sm:$0xff]
      %v301 = vld [vmem:[%s223 + $0x228] sm:$0xff]
      %v302 = vld [vmem:[%s223 + $0x230] sm:$0xff]
      %v303 = vld [vmem:[%s223 + $0x238] sm:$0xff]
      %v304 = vld [vmem:[%s223 + $0x240] sm:$0xff]
      %v305 = vld [vmem:[%s223 + $0x248] sm:$0xff]
      %v306 = vld [vmem:[%s223 + $0x250] sm:$0xff]
      %v307 = vld [vmem:[%s223 + $0x258] sm:$0xff]
      %v308 = vld [vmem:[%s223 + $0x260] sm:$0xff]
      %v309 = vld [vmem:[%s223 + $0x268] sm:$0xff]
      %v310 = vld [vmem:[%s223 + $0x270] sm:$0xff]
      %v311 = vld [vmem:[%s223 + $0x278] sm:$0xff]
      %v312 = vld [vmem:[%s223 + $0x280] sm:$0xff]
      %v313 = vld [vmem:[%s223 + $0x288] sm:$0xff]
      %v314 = vld [vmem:[%s223 + $0x290] sm:$0xff]
      %v315 = vld [vmem:[%s223 + $0x298] sm:$0xff]
      %v316 = vld [vmem:[%s223 + $0x2a0] sm:$0xff]
      %v317 = vld [vmem:[%s223 + $0x2a8] sm:$0xff]
      %v318 = vld [vmem:[%s223 + $0x2b0] sm:$0xff]
      %v319 = vld [vmem:[%s223 + $0x2b8] sm:$0xff]
      %v320 = vld [vmem:[%s223 + $0x2c0] sm:$0xff]
      %v321 = vld [vmem:[%s223 + $0x2c8] sm:$0xff]
      %v322 = vld [vmem:[%s223 + $0x2d0] sm:$0xff]
      %v323 = vld [vmem:[%s223 + $0x2d8] sm:$0xff]
      %v324 = vld [vmem:[%s223 + $0x2e0] sm:$0xff]
      %v325 = vld [vmem:[%s223 + $0x2e8] sm:$0xff]
      %v326 = vld [vmem:[%s223 + $0x2f0] sm:$0xff]
      %v327 = vld [vmem:[%s223 + $0x2f8] sm:$0xff]
      %v328 = vld [vmem:[%s223 + $0x300] sm:$0xff]
      %v329 = vld [vmem:[%s223 + $0x308] sm:$0xff]
      %v330 = vld [vmem:[%s223 + $0x310] sm:$0xff]
      %v331 = vld [vmem:[%s223 + $0x318] sm:$0xff]
      %v332 = vld [vmem:[%s223 + $0x320] sm:$0xff]
      %v333 = vld [vmem:[%s223 + $0x328] sm:$0xff]
      %v334 = vld [vmem:[%s223 + $0x330] sm:$0xff]
      %v335 = vld [vmem:[%s223 + $0x338] sm:$0xff]
      %v336 = vld [vmem:[%s223 + $0x340] sm:$0xff]
      %v337 = vld [vmem:[%s223 + $0x348] sm:$0xff]
      %v338 = vld [vmem:[%s223 + $0x350] sm:$0xff]
      %v339 = vld [vmem:[%s223 + $0x358] sm:$0xff]
      %v340 = vld [vmem:[%s223 + $0x360] sm:$0xff]
      %v341 = vld [vmem:[%s223 + $0x368] sm:$0xff]
      %v342 = vld [vmem:[%s223 + $0x370] sm:$0xff]
      %v343 = vld [vmem:[%s223 + $0x378] sm:$0xff]
      %v344 = vpack.c.bf16 %v239, %v232
      %v345 = vpack.c.bf16 %v240, %v233
      %v346 = vpack.c.bf16 %v241, %v234
      %v347 = vpack.c.bf16 %v242, %v235
      %v348 = vpack.c.bf16 %v243, %v236
      %v349 = vpack.c.bf16 %v244, %v237
      %v350 = vpack.c.bf16 %v245, %v238
      %v351 = vpack.c.bf16 %v253, %v246
      %v352 = vpack.c.bf16 %v254, %v247
      %v353 = vpack.c.bf16 %v255, %v248
      %v354 = vpack.c.bf16 %v256, %v249
      %v355 = vpack.c.bf16 %v257, %v250
      %v356 = vpack.c.bf16 %v258, %v251
      %v357 = vpack.c.bf16 %v259, %v252
      %v358 = vpack.c.bf16 %v267, %v260
      %v359 = vpack.c.bf16 %v268, %v261
      %v360 = vpack.c.bf16 %v269, %v262
      %v361 = vpack.c.bf16 %v270, %v263
      %v362 = vpack.c.bf16 %v271, %v264
      %v363 = vpack.c.bf16 %v272, %v265
      %v364 = vpack.c.bf16 %v273, %v266
      %v365 = vpack.c.bf16 %v281, %v274
      %v366 = vpack.c.bf16 %v282, %v275
      %v367 = vpack.c.bf16 %v283, %v276
      %v368 = vpack.c.bf16 %v284, %v277
      %v369 = vpack.c.bf16 %v285, %v278
      %v370 = vpack.c.bf16 %v286, %v279
      %v371 = vpack.c.bf16 %v287, %v280
      %v372 = vpack.c.bf16 %v295, %v288
      %v373 = vpack.c.bf16 %v296, %v289
      %v374 = vpack.c.bf16 %v297, %v290
      %v375 = vpack.c.bf16 %v298, %v291
      %v376 = vpack.c.bf16 %v299, %v292
      %v377 = vpack.c.bf16 %v300, %v293
      %v378 = vpack.c.bf16 %v301, %v294
      %v379 = vpack.c.bf16 %v309, %v302
      %v380 = vpack.c.bf16 %v310, %v303
      %v381 = vpack.c.bf16 %v311, %v304
      %v382 = vpack.c.bf16 %v312, %v305
      %v383 = vpack.c.bf16 %v313, %v306
      %v384 = vpack.c.bf16 %v314, %v307
      %v385 = vpack.c.bf16 %v315, %v308
      %v386 = vpack.c.bf16 %v323, %v316
      %v387 = vpack.c.bf16 %v324, %v317
      %v388 = vpack.c.bf16 %v325, %v318
      %v389 = vpack.c.bf16 %v326, %v319
      %v390 = vpack.c.bf16 %v327, %v320
      %v391 = vpack.c.bf16 %v328, %v321
      %v392 = vpack.c.bf16 %v329, %v322
      %v393 = vpack.c.bf16 %v337, %v330
      %v394 = vpack.c.bf16 %v338, %v331
      %v395 = vpack.c.bf16 %v339, %v332
      %v396 = vpack.c.bf16 %v340, %v333
      %v397 = vpack.c.bf16 %v341, %v334
      %v398 = vpack.c.bf16 %v342, %v335
      %v399 = vpack.c.bf16 %v343, %v336
      %v400 = vld [vmem:[%s1] sm:$0xff]
      %v401 = vld [vmem:[%s1 + $0x8] sm:$0xff]
      %v402 = vld [vmem:[%s1 + $0x10] sm:$0xff]
      %v403 = vld [vmem:[%s1 + $0x18] sm:$0xff]
      %v404 = vld [vmem:[%s1 + $0x20] sm:$0xff]
      %v405 = vld [vmem:[%s1 + $0x28] sm:$0xff]
      %v406 = vld [vmem:[%s1 + $0x30] sm:$0xff]
      %v407 = vld [vmem:[%s1 + $0x38] sm:$0xff]
      %v408 = vld [vmem:[%s1 + $0x40] sm:$0xff]
      %v409 = vld [vmem:[%s1 + $0x48] sm:$0xff]
      %v410 = vld [vmem:[%s1 + $0x50] sm:$0xff]
      %v411 = vld [vmem:[%s1 + $0x58] sm:$0xff]
      %v412 = vld [vmem:[%s1 + $0x60] sm:$0xff]
      %v413 = vld [vmem:[%s1 + $0x68] sm:$0xff]
      %v414 = vld [vmem:[%s1 + $0x70] sm:$0xff]
      %v415 = vld [vmem:[%s1 + $0x78] sm:$0xff]
      %v416 = vld [vmem:[%s1 + $0x80] sm:$0xff]
      %v417 = vld [vmem:[%s1 + $0x88] sm:$0xff]
      %v418 = vld [vmem:[%s1 + $0x90] sm:$0xff]
      %v419 = vld [vmem:[%s1 + $0x98] sm:$0xff]
      %v420 = vld [vmem:[%s1 + $0xa0] sm:$0xff]
      %v421 = vld [vmem:[%s1 + $0xa8] sm:$0xff]
      %v422 = vld [vmem:[%s1 + $0xb0] sm:$0xff]
      %v423 = vld [vmem:[%s1 + $0xb8] sm:$0xff]
      %v424 = vld [vmem:[%s1 + $0xc0] sm:$0xff]
      %v425 = vld [vmem:[%s1 + $0xc8] sm:$0xff]
      %v426 = vld [vmem:[%s1 + $0xd0] sm:$0xff]
      %v427 = vld [vmem:[%s1 + $0xd8] sm:$0xff]
      %v428 = vld [vmem:[%s1 + $0xe0] sm:$0xff]
      %v429 = vld [vmem:[%s1 + $0xe8] sm:$0xff]
      %v430 = vld [vmem:[%s1 + $0xf0] sm:$0xff]
      %v431 = vld [vmem:[%s1 + $0xf8] sm:$0xff]
      %v432 = vld [vmem:[%s1 + $0x100] sm:$0xff]
      %v433 = vld [vmem:[%s1 + $0x108] sm:$0xff]
      %v434 = vld [vmem:[%s1 + $0x110] sm:$0xff]
      %v435 = vld [vmem:[%s1 + $0x118] sm:$0xff]
      %v436 = vld [vmem:[%s1 + $0x120] sm:$0xff]
      %v437 = vld [vmem:[%s1 + $0x128] sm:$0xff]
      %v438 = vld [vmem:[%s1 + $0x130] sm:$0xff]
      %v439 = vld [vmem:[%s1 + $0x138] sm:$0xff]
      %v440 = vld [vmem:[%s1 + $0x140] sm:$0xff]
      %v441 = vld [vmem:[%s1 + $0x148] sm:$0xff]
      %v442 = vld [vmem:[%s1 + $0x150] sm:$0xff]
      %v443 = vld [vmem:[%s1 + $0x158] sm:$0xff]
      %v444 = vld [vmem:[%s1 + $0x160] sm:$0xff]
      %v445 = vld [vmem:[%s1 + $0x168] sm:$0xff]
      %v446 = vld [vmem:[%s1 + $0x170] sm:$0xff]
      %v447 = vld [vmem:[%s1 + $0x178] sm:$0xff]
      %v448 = vld [vmem:[%s1 + $0x180] sm:$0xff]
      %v449 = vld [vmem:[%s1 + $0x188] sm:$0xff]
      %v450 = vld [vmem:[%s1 + $0x190] sm:$0xff]
      %v451 = vld [vmem:[%s1 + $0x198] sm:$0xff]
      %v452 = vld [vmem:[%s1 + $0x1a0] sm:$0xff]
      %v453 = vld [vmem:[%s1 + $0x1a8] sm:$0xff]
      %v454 = vld [vmem:[%s1 + $0x1b0] sm:$0xff]
      %v455 = vld [vmem:[%s1 + $0x1b8] sm:$0xff]
      %v456 = vld [vmem:[%s1 + $0x1c0] sm:$0xff]
      %v457 = vld [vmem:[%s1 + $0x1c8] sm:$0xff]
      %v458 = vld [vmem:[%s1 + $0x1d0] sm:$0xff]
      %v459 = vld [vmem:[%s1 + $0x1d8] sm:$0xff]
      %v460 = vld [vmem:[%s1 + $0x1e0] sm:$0xff]
      %v461 = vld [vmem:[%s1 + $0x1e8] sm:$0xff]
      %v462 = vld [vmem:[%s1 + $0x1f0] sm:$0xff]
      %v463 = vld [vmem:[%s1 + $0x1f8] sm:$0xff]
      %v464 = vld [vmem:[%s1 + $0x200] sm:$0xff]
      %v465 = vld [vmem:[%s1 + $0x208] sm:$0xff]
      %v466 = vld [vmem:[%s1 + $0x210] sm:$0xff]
      %v467 = vld [vmem:[%s1 + $0x218] sm:$0xff]
      %v468 = vld [vmem:[%s1 + $0x220] sm:$0xff]
      %v469 = vld [vmem:[%s1 + $0x228] sm:$0xff]
      %v470 = vld [vmem:[%s1 + $0x230] sm:$0xff]
      %v471 = vld [vmem:[%s1 + $0x238] sm:$0xff]
      %v472 = vld [vmem:[%s1 + $0x240] sm:$0xff]
      %v473 = vld [vmem:[%s1 + $0x248] sm:$0xff]
      %v474 = vld [vmem:[%s1 + $0x250] sm:$0xff]
      %v475 = vld [vmem:[%s1 + $0x258] sm:$0xff]
      %v476 = vld [vmem:[%s1 + $0x260] sm:$0xff]
      %v477 = vld [vmem:[%s1 + $0x268] sm:$0xff]
      %v478 = vld [vmem:[%s1 + $0x270] sm:$0xff]
      %v479 = vld [vmem:[%s1 + $0x278] sm:$0xff]
      %v480 = vld [vmem:[%s1 + $0x280] sm:$0xff]
      %v481 = vld [vmem:[%s1 + $0x288] sm:$0xff]
      %v482 = vld [vmem:[%s1 + $0x290] sm:$0xff]
      %v483 = vld [vmem:[%s1 + $0x298] sm:$0xff]
      %v484 = vld [vmem:[%s1 + $0x2a0] sm:$0xff]
      %v485 = vld [vmem:[%s1 + $0x2a8] sm:$0xff]
      %v486 = vld [vmem:[%s1 + $0x2b0] sm:$0xff]
      %v487 = vld [vmem:[%s1 + $0x2b8] sm:$0xff]
      %v488 = vld [vmem:[%s1 + $0x2c0] sm:$0xff]
      %v489 = vld [vmem:[%s1 + $0x2c8] sm:$0xff]
      %v490 = vld [vmem:[%s1 + $0x2d0] sm:$0xff]
      %v491 = vld [vmem:[%s1 + $0x2d8] sm:$0xff]
      %v492 = vld [vmem:[%s1 + $0x2e0] sm:$0xff]
      %v493 = vld [vmem:[%s1 + $0x2e8] sm:$0xff]
      %v494 = vld [vmem:[%s1 + $0x2f0] sm:$0xff]
      %v495 = vld [vmem:[%s1 + $0x2f8] sm:$0xff]
      %v496 = vld [vmem:[%s1 + $0x300] sm:$0xff]
      %v497 = vld [vmem:[%s1 + $0x308] sm:$0xff]
      %v498 = vld [vmem:[%s2] sm:$0x3]
      %v500 = vlaneseq
      %v501 = vshrl.u32 %v500, 7
      %v502 = vsub.s32 0, %v501
      %v503 = vrot.slane %v498, %v502
      %v504 = vlaneseq
      %v505 = vshrl.u32 %v504, 7
      %v506 = vsub.s32 1, %v505
      %v507 = vrot.slane %v498, %v506
      %v608 = vunpack.c.l.b16 %v400
      %v609 = vunpack.c.h.b16 %v400
      %v610 = vunpack.c.l.b16 %v401
      %v611 = vunpack.c.h.b16 %v401
      %v612 = vunpack.c.l.b16 %v402
      %v613 = vunpack.c.h.b16 %v402
      %v614 = vunpack.c.l.b16 %v403
      %v615 = vunpack.c.h.b16 %v403
      %v616 = vunpack.c.l.b16 %v404
      %v617 = vunpack.c.h.b16 %v404
      %v618 = vunpack.c.l.b16 %v405
      %v619 = vunpack.c.h.b16 %v405
      %v620 = vunpack.c.l.b16 %v406
      %v621 = vunpack.c.h.b16 %v406
      %v622 = vunpack.c.l.b16 %v407
      %v623 = vunpack.c.h.b16 %v407
      %v624 = vunpack.c.l.b16 %v408
      %v625 = vunpack.c.h.b16 %v408
      %v626 = vunpack.c.l.b16 %v409
      %v627 = vunpack.c.h.b16 %v409
      %v628 = vunpack.c.l.b16 %v410
      %v629 = vunpack.c.h.b16 %v410
      %v630 = vunpack.c.l.b16 %v411
      %v631 = vunpack.c.h.b16 %v411
      %v632 = vunpack.c.l.b16 %v412
      %v633 = vunpack.c.h.b16 %v412
      %v634 = vunpack.c.l.b16 %v413
      %v635 = vunpack.c.h.b16 %v413
      %v636 = vunpack.c.l.b16 %v414
      %v637 = vunpack.c.h.b16 %v414
      %v638 = vunpack.c.l.b16 %v415
      %v639 = vunpack.c.h.b16 %v415
      %v640 = vunpack.c.l.b16 %v416
      %v641 = vunpack.c.h.b16 %v416
      %v642 = vunpack.c.l.b16 %v417
      %v643 = vunpack.c.h.b16 %v417
      %v644 = vunpack.c.l.b16 %v418
      %v645 = vunpack.c.h.b16 %v418
      %v646 = vunpack.c.l.b16 %v419
      %v647 = vunpack.c.h.b16 %v419
      %v648 = vunpack.c.l.b16 %v420
      %v649 = vunpack.c.h.b16 %v420
      %v650 = vunpack.c.l.b16 %v421
      %v651 = vunpack.c.h.b16 %v421
      %v652 = vunpack.c.l.b16 %v422
      %v653 = vunpack.c.h.b16 %v422
      %v654 = vunpack.c.l.b16 %v423
      %v655 = vunpack.c.h.b16 %v423
      %v656 = vunpack.c.l.b16 %v424
      %v657 = vunpack.c.h.b16 %v424
      %v658 = vunpack.c.l.b16 %v425
      %v659 = vunpack.c.h.b16 %v425
      %v660 = vunpack.c.l.b16 %v426
      %v661 = vunpack.c.h.b16 %v426
      %v662 = vunpack.c.l.b16 %v427
      %v663 = vunpack.c.h.b16 %v427
      %v664 = vunpack.c.l.b16 %v428
      %v665 = vunpack.c.h.b16 %v428
      %v666 = vunpack.c.l.b16 %v429
      %v667 = vunpack.c.h.b16 %v429
      %v668 = vunpack.c.l.b16 %v430
      %v669 = vunpack.c.h.b16 %v430
      %v670 = vunpack.c.l.b16 %v431
      %v671 = vunpack.c.h.b16 %v431
      %v672 = vunpack.c.l.b16 %v432
      %v673 = vunpack.c.h.b16 %v432
      %v674 = vunpack.c.l.b16 %v433
      %v675 = vunpack.c.h.b16 %v433
      %v676 = vunpack.c.l.b16 %v434
      %v677 = vunpack.c.h.b16 %v434
      %v678 = vunpack.c.l.b16 %v435
      %v679 = vunpack.c.h.b16 %v435
      %v680 = vunpack.c.l.b16 %v436
      %v681 = vunpack.c.h.b16 %v436
      %v682 = vunpack.c.l.b16 %v437
      %v683 = vunpack.c.h.b16 %v437
      %v684 = vunpack.c.l.b16 %v438
      %v685 = vunpack.c.h.b16 %v438
      %v686 = vunpack.c.l.b16 %v439
      %v687 = vunpack.c.h.b16 %v439
      %v688 = vunpack.c.l.b16 %v440
      %v689 = vunpack.c.h.b16 %v440
      %v690 = vunpack.c.l.b16 %v441
      %v691 = vunpack.c.h.b16 %v441
      %v692 = vunpack.c.l.b16 %v442
      %v693 = vunpack.c.h.b16 %v442
      %v694 = vunpack.c.l.b16 %v443
      %v695 = vunpack.c.h.b16 %v443
      %v696 = vunpack.c.l.b16 %v444
      %v697 = vunpack.c.h.b16 %v444
      %v698 = vunpack.c.l.b16 %v445
      %v699 = vunpack.c.h.b16 %v445
      %v700 = vunpack.c.l.b16 %v446
      %v701 = vunpack.c.h.b16 %v446
      %v702 = vunpack.c.l.b16 %v447
      %v703 = vunpack.c.h.b16 %v447
      %v704 = vunpack.c.l.b16 %v448
      %v705 = vunpack.c.h.b16 %v448
      %v706 = vunpack.c.l.b16 %v449
      %v707 = vunpack.c.h.b16 %v449
      %v708 = vunpack.c.l.b16 %v450
      %v709 = vunpack.c.h.b16 %v450
      %v710 = vunpack.c.l.b16 %v451
      %v711 = vunpack.c.h.b16 %v451
      %v712 = vunpack.c.l.b16 %v452
      %v713 = vunpack.c.h.b16 %v452
      %v714 = vunpack.c.l.b16 %v453
      %v715 = vunpack.c.h.b16 %v453
      %v716 = vunpack.c.l.b16 %v454
      %v717 = vunpack.c.h.b16 %v454
      %v718 = vunpack.c.l.b16 %v455
      %v719 = vunpack.c.h.b16 %v455
      %v720 = vunpack.c.l.b16 %v456
      %v721 = vunpack.c.h.b16 %v456
      %v722 = vunpack.c.l.b16 %v457
      %v723 = vunpack.c.h.b16 %v457
      %v724 = vunpack.c.l.b16 %v458
      %v725 = vunpack.c.h.b16 %v458
      %v726 = vunpack.c.l.b16 %v459
      %v727 = vunpack.c.h.b16 %v459
      %v728 = vunpack.c.l.b16 %v460
      %v729 = vunpack.c.h.b16 %v460
      %v730 = vunpack.c.l.b16 %v461
      %v731 = vunpack.c.h.b16 %v461
      %v732 = vunpack.c.l.b16 %v462
      %v733 = vunpack.c.h.b16 %v462
      %v734 = vunpack.c.l.b16 %v463
      %v735 = vunpack.c.h.b16 %v463
      %v736 = vunpack.c.l.b16 %v464
      %v737 = vunpack.c.h.b16 %v464
      %v738 = vunpack.c.l.b16 %v465
      %v739 = vunpack.c.h.b16 %v465
      %v740 = vunpack.c.l.b16 %v466
      %v741 = vunpack.c.h.b16 %v466
      %v742 = vunpack.c.l.b16 %v467
      %v743 = vunpack.c.h.b16 %v467
      %v744 = vunpack.c.l.b16 %v468
      %v745 = vunpack.c.h.b16 %v468
      %v746 = vunpack.c.l.b16 %v469
      %v747 = vunpack.c.h.b16 %v469
      %v748 = vunpack.c.l.b16 %v470
      %v749 = vunpack.c.h.b16 %v470
      %v750 = vunpack.c.l.b16 %v471
      %v751 = vunpack.c.h.b16 %v471
      %v752 = vunpack.c.l.b16 %v472
      %v753 = vunpack.c.h.b16 %v472
      %v754 = vunpack.c.l.b16 %v473
      %v755 = vunpack.c.h.b16 %v473
      %v756 = vunpack.c.l.b16 %v474
      %v757 = vunpack.c.h.b16 %v474
      %v758 = vunpack.c.l.b16 %v475
      %v759 = vunpack.c.h.b16 %v475
      %v760 = vunpack.c.l.b16 %v476
      %v761 = vunpack.c.h.b16 %v476
      %v762 = vunpack.c.l.b16 %v477
      %v763 = vunpack.c.h.b16 %v477
      %v764 = vunpack.c.l.b16 %v478
      %v765 = vunpack.c.h.b16 %v478
      %v766 = vunpack.c.l.b16 %v479
      %v767 = vunpack.c.h.b16 %v479
      %v768 = vunpack.c.l.b16 %v480
      %v769 = vunpack.c.h.b16 %v480
      %v770 = vunpack.c.l.b16 %v481
      %v771 = vunpack.c.h.b16 %v481
      %v772 = vunpack.c.l.b16 %v482
      %v773 = vunpack.c.h.b16 %v482
      %v774 = vunpack.c.l.b16 %v483
      %v775 = vunpack.c.h.b16 %v483
      %v776 = vunpack.c.l.b16 %v484
      %v777 = vunpack.c.h.b16 %v484
      %v778 = vunpack.c.l.b16 %v485
      %v779 = vunpack.c.h.b16 %v485
      %v780 = vunpack.c.l.b16 %v486
      %v781 = vunpack.c.h.b16 %v486
      %v782 = vunpack.c.l.b16 %v487
      %v783 = vunpack.c.h.b16 %v487
      %v784 = vunpack.c.l.b16 %v488
      %v785 = vunpack.c.h.b16 %v488
      %v786 = vunpack.c.l.b16 %v489
      %v787 = vunpack.c.h.b16 %v489
      %v788 = vunpack.c.l.b16 %v490
      %v789 = vunpack.c.h.b16 %v490
      %v790 = vunpack.c.l.b16 %v491
      %v791 = vunpack.c.h.b16 %v491
      %v792 = vunpack.c.l.b16 %v492
      %v793 = vunpack.c.h.b16 %v492
      %v794 = vunpack.c.l.b16 %v493
      %v795 = vunpack.c.h.b16 %v493
      %v796 = vunpack.c.l.b16 %v494
      %v797 = vunpack.c.h.b16 %v494
      %v798 = vunpack.c.l.b16 %v495
      %v799 = vunpack.c.h.b16 %v495
      %v800 = vunpack.c.l.b16 %v496
      %v801 = vunpack.c.h.b16 %v496
      %v802 = vunpack.c.l.b16 %v497
      %v803 = vunpack.c.h.b16 %v497
      %v804 = vpack.c.b16 %v610, %v608
      %v805 = vpack.c.b16 %v611, %v609
      %v806 = vpack.c.b16 %v614, %v612
      %v807 = vpack.c.b16 %v615, %v613
      %v808 = vpack.c.b16 %v618, %v616
      %v809 = vpack.c.b16 %v619, %v617
      %v810 = vpack.c.b16 %v622, %v620
      %v811 = vpack.c.b16 %v623, %v621
      %v812 = vpack.c.b16 %v626, %v624
      %v813 = vpack.c.b16 %v627, %v625
      %v814 = vpack.c.b16 %v630, %v628
      %v815 = vpack.c.b16 %v631, %v629
      %v816 = vpack.c.b16 %v634, %v632
      %v817 = vpack.c.b16 %v635, %v633
      %v818 = vpack.c.b16 %v638, %v636
      %v819 = vpack.c.b16 %v639, %v637
      %v820 = vpack.c.b16 %v642, %v640
      %v821 = vpack.c.b16 %v643, %v641
      %v822 = vpack.c.b16 %v646, %v644
      %v823 = vpack.c.b16 %v647, %v645
      %v824 = vpack.c.b16 %v650, %v648
      %v825 = vpack.c.b16 %v651, %v649
      %v826 = vpack.c.b16 %v654, %v652
      %v827 = vpack.c.b16 %v655, %v653
      %v828 = vpack.c.b16 %v658, %v656
      %v829 = vpack.c.b16 %v659, %v657
      %v830 = vpack.c.b16 %v662, %v660
      %v831 = vpack.c.b16 %v663, %v661
      %v832 = vpack.c.b16 %v666, %v664
      %v833 = vpack.c.b16 %v667, %v665
      %v834 = vpack.c.b16 %v670, %v668
      %v835 = vpack.c.b16 %v671, %v669
      %v836 = vpack.c.b16 %v674, %v672
      %v837 = vpack.c.b16 %v675, %v673
      %v838 = vpack.c.b16 %v678, %v676
      %v839 = vpack.c.b16 %v679, %v677
      %v840 = vpack.c.b16 %v682, %v680
      %v841 = vpack.c.b16 %v683, %v681
      %v842 = vpack.c.b16 %v686, %v684
      %v843 = vpack.c.b16 %v687, %v685
      %v844 = vpack.c.b16 %v690, %v688
      %v845 = vpack.c.b16 %v691, %v689
      %v846 = vpack.c.b16 %v694, %v692
      %v847 = vpack.c.b16 %v695, %v693
      %v848 = vpack.c.b16 %v698, %v696
      %v849 = vpack.c.b16 %v699, %v697
      %v850 = vpack.c.b16 %v702, %v700
      %v851 = vpack.c.b16 %v703, %v701
      %v852 = vpack.c.b16 %v706, %v704
      %v853 = vpack.c.b16 %v707, %v705
      %v854 = vpack.c.b16 %v710, %v708
      %v855 = vpack.c.b16 %v711, %v709
      %v856 = vpack.c.b16 %v714, %v712
      %v857 = vpack.c.b16 %v715, %v713
      %v858 = vpack.c.b16 %v718, %v716
      %v859 = vpack.c.b16 %v719, %v717
      %v860 = vpack.c.b16 %v722, %v720
      %v861 = vpack.c.b16 %v723, %v721
      %v862 = vpack.c.b16 %v726, %v724
      %v863 = vpack.c.b16 %v727, %v725
      %v864 = vpack.c.b16 %v730, %v728
      %v865 = vpack.c.b16 %v731, %v729
      %v866 = vpack.c.b16 %v734, %v732
      %v867 = vpack.c.b16 %v735, %v733
      %v868 = vpack.c.b16 %v738, %v736
      %v869 = vpack.c.b16 %v739, %v737
      %v870 = vpack.c.b16 %v742, %v740
      %v871 = vpack.c.b16 %v743, %v741
      %v872 = vpack.c.b16 %v746, %v744
      %v873 = vpack.c.b16 %v747, %v745
      %v874 = vpack.c.b16 %v750, %v748
      %v875 = vpack.c.b16 %v751, %v749
      %v876 = vpack.c.b16 %v754, %v752
      %v877 = vpack.c.b16 %v755, %v753
      %v878 = vpack.c.b16 %v758, %v756
      %v879 = vpack.c.b16 %v759, %v757
      %v880 = vpack.c.b16 %v762, %v760
      %v881 = vpack.c.b16 %v763, %v761
      %v882 = vpack.c.b16 %v766, %v764
      %v883 = vpack.c.b16 %v767, %v765
      %v884 = vpack.c.b16 %v770, %v768
      %v885 = vpack.c.b16 %v771, %v769
      %v886 = vpack.c.b16 %v774, %v772
      %v887 = vpack.c.b16 %v775, %v773
      %v888 = vpack.c.b16 %v778, %v776
      %v889 = vpack.c.b16 %v779, %v777
      %v890 = vpack.c.b16 %v782, %v780
      %v891 = vpack.c.b16 %v783, %v781
      %v892 = vpack.c.b16 %v786, %v784
      %v893 = vpack.c.b16 %v787, %v785
      %v894 = vpack.c.b16 %v790, %v788
      %v895 = vpack.c.b16 %v791, %v789
      %v896 = vpack.c.b16 %v794, %v792
      %v897 = vpack.c.b16 %v795, %v793
      %v898 = vpack.c.b16 %v798, %v796
      %v899 = vpack.c.b16 %v799, %v797
      %v900 = vpack.c.b16 %v802, %v800
      %v901 = vpack.c.b16 %v803, %v801
      %vm1000 = vcmask 130048
      %v1002 = vsel %vm1000, %v350, 0
      %v1005 = vsel %vm1000, %v357, 0
      %v1008 = vsel %vm1000, %v364, 0
      %v1011 = vsel %vm1000, %v371, 0
      %v1014 = vsel %vm1000, %v378, 0
      %v1017 = vsel %vm1000, %v385, 0
      %v1020 = vsel %vm1000, %v392, 0
      %v1023 = vsel %vm1000, %v399, 0
      %1025 = vmatprep.subr.bf16.mxu0 %v805
      %1026 = vmatpush1.bf16.msra.mxu0 %v804
      %1027 = vmatprep.subr.bf16.mxu0 %v807
      %1028 = vmatpush1.bf16.msra.mxu0 %v806
      %1029 = vmatprep.subr.bf16.mxu0 %v809
      %1030 = vmatpush1.bf16.msra.mxu0 %v808
      %1031 = vmatprep.subr.bf16.mxu0 %v811
      %1032 = vmatpush1.bf16.msra.mxu0 %v810
      %1033 = vmatprep.subr.bf16.mxu0 %v813
      %1034 = vmatpush1.bf16.msra.mxu0 %v812
      %1035 = vmatprep.subr.bf16.mxu0 %v815
      %1036 = vmatpush1.bf16.msra.mxu0 %v814
      %1037 = vmatprep.subr.bf16.mxu0 %v817
      %1038 = vmatpush1.bf16.msra.mxu0 %v816
      %1039 = vmatprep.subr.bf16.mxu0 %v819
      %1040 = vmatpush1.bf16.msra.mxu0 %v818
      %1041 = vmatprep.subr.bf16.mxu0 %v821
      %1042 = vmatpush1.bf16.msra.mxu0 %v820
      %1043 = vmatprep.subr.bf16.mxu0 %v823
      %1044 = vmatpush1.bf16.msra.mxu0 %v822
      %1045 = vmatprep.subr.bf16.mxu0 %v825
      %1046 = vmatpush1.bf16.msra.mxu0 %v824
      %1047 = vmatprep.subr.bf16.mxu0 %v827
      %1048 = vmatpush1.bf16.msra.mxu0 %v826
      %1049 = vmatprep.subr.bf16.mxu0 %v829
      %1050 = vmatpush1.bf16.msra.mxu0 %v828
      %1051 = vmatprep.subr.bf16.mxu0 %v831
      %1052 = vmatpush1.bf16.msra.mxu0 %v830
      %1053 = vmatprep.subr.bf16.mxu0 %v833
      %1054 = vmatpush1.bf16.msra.mxu0 %v832
      %1055 = vmatprep.subr.bf16.mxu0 %v835
      %1056 = vmatpush1.bf16.msra.mxu0 %v834
      %1057 = vmatprep.mubr.bf16.mxu0 %v345
      %1058 = vmatmul.mubr.bf16.gmra.mrb[0].mxu0 %v344
      %v1059 = vpop.f32.mrb[0].mxu0
      %v1060 = vadd.f32 %v503, %v1059
      %v1061 = vpop.f32.mrb[0].mxu0
      %v1062 = vadd.f32 %v507, %v1061
      %v1063 = vpop.f32.mrb[0].mxu0
      %v1064 = vadd.f32 %v503, %v1063
      %v1065 = vpop.f32.mrb[0].mxu0
      %v1066 = vadd.f32 %v507, %v1065
      %1067 = vmatprep.mubr.bf16.mxu0 %v352
      %1068 = vmatmul.mubr.bf16.gmra.mrb[0].mxu0 %v351
      %v1069 = vpop.f32.mrb[0].mxu0
      %v1070 = vadd.f32 %v503, %v1069
      %v1071 = vpop.f32.mrb[0].mxu0
      %v1072 = vadd.f32 %v507, %v1071
      %v1073 = vpop.f32.mrb[0].mxu0
      %v1074 = vadd.f32 %v503, %v1073
      %v1075 = vpop.f32.mrb[0].mxu0
      %v1076 = vadd.f32 %v507, %v1075
      %1077 = vmatprep.mubr.bf16.mxu0 %v359
      %1078 = vmatmul.mubr.bf16.gmra.mrb[0].mxu0 %v358
      %v1079 = vpop.f32.mrb[0].mxu0
      %v1080 = vadd.f32 %v503, %v1079
      %v1081 = vpop.f32.mrb[0].mxu0
      %v1082 = vadd.f32 %v507, %v1081
      %v1083 = vpop.f32.mrb[0].mxu0
      %v1084 = vadd.f32 %v503, %v1083
      %v1085 = vpop.f32.mrb[0].mxu0
      %v1086 = vadd.f32 %v507, %v1085
      %1087 = vmatprep.mubr.bf16.mxu0 %v366
      %1088 = vmatmul.mubr.bf16.gmra.mrb[0].mxu0 %v365
      %v1089 = vpop.f32.mrb[0].mxu0
      %v1090 = vadd.f32 %v503, %v1089
      %v1091 = vpop.f32.mrb[0].mxu0
      %v1092 = vadd.f32 %v507, %v1091
      %v1093 = vpop.f32.mrb[0].mxu0
      %v1094 = vadd.f32 %v503, %v1093
      %v1095 = vpop.f32.mrb[0].mxu0
      %v1096 = vadd.f32 %v507, %v1095
      %1097 = vmatprep.mubr.bf16.mxu0 %v373
      %1098 = vmatmul.mubr.bf16.gmra.mrb[0].mxu0 %v372
      %v1099 = vpop.f32.mrb[0].mxu0
      %v1100 = vadd.f32 %v503, %v1099
      %v1101 = vpop.f32.mrb[0].mxu0
      %v1102 = vadd.f32 %v507, %v1101
      %v1103 = vpop.f32.mrb[0].mxu0
      %v1104 = vadd.f32 %v503, %v1103
      %v1105 = vpop.f32.mrb[0].mxu0
      %v1106 = vadd.f32 %v507, %v1105
      %1107 = vmatprep.mubr.bf16.mxu0 %v380
      %1108 = vmatmul.mubr.bf16.gmra.mrb[0].mxu0 %v379
      %v1109 = vpop.f32.mrb[0].mxu0
      %v1110 = vadd.f32 %v503, %v1109
      %v1111 = vpop.f32.mrb[0].mxu0
      %v1112 = vadd.f32 %v507, %v1111
      %v1113 = vpop.f32.mrb[0].mxu0
      %v1114 = vadd.f32 %v503, %v1113
      %v1115 = vpop.f32.mrb[0].mxu0
      %v1116 = vadd.f32 %v507, %v1115
      %1117 = vmatprep.mubr.bf16.mxu0 %v387
      %1118 = vmatmul.mubr.bf16.gmra.mrb[0].mxu0 %v386
      %v1119 = vpop.f32.mrb[0].mxu0
      %v1120 = vadd.f32 %v503, %v1119
      %v1121 = vpop.f32.mrb[0].mxu0
      %v1122 = vadd.f32 %v507, %v1121
      %v1123 = vpop.f32.mrb[0].mxu0
      %v1124 = vadd.f32 %v503, %v1123
      %v1125 = vpop.f32.mrb[0].mxu0
      %v1126 = vadd.f32 %v507, %v1125
      %1127 = vmatprep.mubr.bf16.mxu0 %v394
      %1128 = vmatmul.mubr.bf16.gmra.mrb[0].mxu0 %v393
      %v1129 = vpop.f32.mrb[0].mxu0
      %v1130 = vadd.f32 %v503, %v1129
      %v1131 = vpop.f32.mrb[0].mxu0
      %v1132 = vadd.f32 %v507, %v1131
      %v1133 = vpop.f32.mrb[0].mxu0
      %v1134 = vadd.f32 %v503, %v1133
      %v1135 = vpop.f32.mrb[0].mxu0
      %v1136 = vadd.f32 %v507, %v1135
      %1137 = vdwg.mxu0
      %1138 = vmatprep.subr.bf16.mxu0 %v837
      %1139 = vmatpush1.bf16.msra.mxu0 %v836
      %1140 = vmatprep.subr.bf16.mxu0 %v839
      %1141 = vmatpush1.bf16.msra.mxu0 %v838
      %1142 = vmatprep.subr.bf16.mxu0 %v841
      %1143 = vmatpush1.bf16.msra.mxu0 %v840
      %1144 = vmatprep.subr.bf16.mxu0 %v843
      %1145 = vmatpush1.bf16.msra.mxu0 %v842
      %1146 = vmatprep.subr.bf16.mxu0 %v845
      %1147 = vmatpush1.bf16.msra.mxu0 %v844
      %1148 = vmatprep.subr.bf16.mxu0 %v847
      %1149 = vmatpush1.bf16.msra.mxu0 %v846
      %1150 = vmatprep.subr.bf16.mxu0 %v849
      %1151 = vmatpush1.bf16.msra.mxu0 %v848
      %1152 = vmatprep.subr.bf16.mxu0 %v851
      %1153 = vmatpush1.bf16.msra.mxu0 %v850
      %1154 = vmatprep.subr.bf16.mxu0 %v853
      %1155 = vmatpush1.bf16.msra.mxu0 %v852
      %1156 = vmatprep.subr.bf16.mxu0 %v855
      %1157 = vmatpush1.bf16.msra.mxu0 %v854
      %1158 = vmatprep.subr.bf16.mxu0 %v857
      %1159 = vmatpush1.bf16.msra.mxu0 %v856
      %1160 = vmatprep.subr.bf16.mxu0 %v859
      %1161 = vmatpush1.bf16.msra.mxu0 %v858
      %1162 = vmatprep.subr.bf16.mxu0 %v861
      %1163 = vmatpush1.bf16.msra.mxu0 %v860
      %1164 = vmatprep.subr.bf16.mxu0 %v863
      %1165 = vmatpush1.bf16.msra.mxu0 %v862
      %1166 = vmatprep.subr.bf16.mxu0 %v865
      %1167 = vmatpush1.bf16.msra.mxu0 %v864
      %1168 = vmatprep.subr.bf16.mxu0 %v867
      %1169 = vmatpush1.bf16.msra.mxu0 %v866
      %1170 = vmatprep.mubr.bf16.mxu0 %v347
      %1171 = vmatmul.mubr.bf16.gmra.mrb[0].mxu0 %v346
      %v1172 = vpop.f32.mrb[0].mxu0
      %v1173 = vadd.f32 %v1060, %v1172
      %v1174 = vpop.f32.mrb[0].mxu0
      %v1175 = vadd.f32 %v1062, %v1174
      %v1176 = vpop.f32.mrb[0].mxu0
      %v1177 = vadd.f32 %v1064, %v1176
      %v1178 = vpop.f32.mrb[0].mxu0
      %v1179 = vadd.f32 %v1066, %v1178
      %1180 = vmatprep.mubr.bf16.mxu0 %v354
      %1181 = vmatmul.mubr.bf16.gmra.mrb[0].mxu0 %v353
      %v1182 = vpop.f32.mrb[0].mxu0
      %v1183 = vadd.f32 %v1070, %v1182
      %v1184 = vpop.f32.mrb[0].mxu0
      %v1185 = vadd.f32 %v1072, %v1184
      %v1186 = vpop.f32.mrb[0].mxu0
      %v1187 = vadd.f32 %v1074, %v1186
      %v1188 = vpop.f32.mrb[0].mxu0
      %v1189 = vadd.f32 %v1076, %v1188
      %1190 = vmatprep.mubr.bf16.mxu0 %v361
      %1191 = vmatmul.mubr.bf16.gmra.mrb[0].mxu0 %v360
      %v1192 = vpop.f32.mrb[0].mxu0
      %v1193 = vadd.f32 %v1080, %v1192
      %v1194 = vpop.f32.mrb[0].mxu0
      %v1195 = vadd.f32 %v1082, %v1194
      %v1196 = vpop.f32.mrb[0].mxu0
      %v1197 = vadd.f32 %v1084, %v1196
      %v1198 = vpop.f32.mrb[0].mxu0
      %v1199 = vadd.f32 %v1086, %v1198
      %1200 = vmatprep.mubr.bf16.mxu0 %v368
      %1201 = vmatmul.mubr.bf16.gmra.mrb[0].mxu0 %v367
      %v1202 = vpop.f32.mrb[0].mxu0
      %v1203 = vadd.f32 %v1090, %v1202
      %v1204 = vpop.f32.mrb[0].mxu0
      %v1205 = vadd.f32 %v1092, %v1204
      %v1206 = vpop.f32.mrb[0].mxu0
      %v1207 = vadd.f32 %v1094, %v1206
      %v1208 = vpop.f32.mrb[0].mxu0
      %v1209 = vadd.f32 %v1096, %v1208
      %1210 = vmatprep.mubr.bf16.mxu0 %v375
      %1211 = vmatmul.mubr.bf16.gmra.mrb[0].mxu0 %v374
      %v1212 = vpop.f32.mrb[0].mxu0
      %v1213 = vadd.f32 %v1100, %v1212
      %v1214 = vpop.f32.mrb[0].mxu0
      %v1215 = vadd.f32 %v1102, %v1214
      %v1216 = vpop.f32.mrb[0].mxu0
      %v1217 = vadd.f32 %v1104, %v1216
      %v1218 = vpop.f32.mrb[0].mxu0
      %v1219 = vadd.f32 %v1106, %v1218
      %1220 = vmatprep.mubr.bf16.mxu0 %v382
      %1221 = vmatmul.mubr.bf16.gmra.mrb[0].mxu0 %v381
      %v1222 = vpop.f32.mrb[0].mxu0
      %v1223 = vadd.f32 %v1110, %v1222
      %v1224 = vpop.f32.mrb[0].mxu0
      %v1225 = vadd.f32 %v1112, %v1224
      %v1226 = vpop.f32.mrb[0].mxu0
      %v1227 = vadd.f32 %v1114, %v1226
      %v1228 = vpop.f32.mrb[0].mxu0
      %v1229 = vadd.f32 %v1116, %v1228
      %1230 = vmatprep.mubr.bf16.mxu0 %v389
      %1231 = vmatmul.mubr.bf16.gmra.mrb[0].mxu0 %v388
      %v1232 = vpop.f32.mrb[0].mxu0
      %v1233 = vadd.f32 %v1120, %v1232
      %v1234 = vpop.f32.mrb[0].mxu0
      %v1235 = vadd.f32 %v1122, %v1234
      %v1236 = vpop.f32.mrb[0].mxu0
      %v1237 = vadd.f32 %v1124, %v1236
      %v1238 = vpop.f32.mrb[0].mxu0
      %v1239 = vadd.f32 %v1126, %v1238
      %1240 = vmatprep.mubr.bf16.mxu0 %v396
      %1241 = vmatmul.mubr.bf16.gmra.mrb[0].mxu0 %v395
      %v1242 = vpop.f32.mrb[0].mxu0
      %v1243 = vadd.f32 %v1130, %v1242
      %v1244 = vpop.f32.mrb[0].mxu0
      %v1245 = vadd.f32 %v1132, %v1244
      %v1246 = vpop.f32.mrb[0].mxu0
      %v1247 = vadd.f32 %v1134, %v1246
      %v1248 = vpop.f32.mrb[0].mxu0
      %v1249 = vadd.f32 %v1136, %v1248
      %1250 = vdwg.mxu0
      %1251 = vmatprep.subr.bf16.mxu0 %v869
      %1252 = vmatpush1.bf16.msra.mxu0 %v868
      %1253 = vmatprep.subr.bf16.mxu0 %v871
      %1254 = vmatpush1.bf16.msra.mxu0 %v870
      %1255 = vmatprep.subr.bf16.mxu0 %v873
      %1256 = vmatpush1.bf16.msra.mxu0 %v872
      %1257 = vmatprep.subr.bf16.mxu0 %v875
      %1258 = vmatpush1.bf16.msra.mxu0 %v874
      %1259 = vmatprep.subr.bf16.mxu0 %v877
      %1260 = vmatpush1.bf16.msra.mxu0 %v876
      %1261 = vmatprep.subr.bf16.mxu0 %v879
      %1262 = vmatpush1.bf16.msra.mxu0 %v878
      %1263 = vmatprep.subr.bf16.mxu0 %v881
      %1264 = vmatpush1.bf16.msra.mxu0 %v880
      %1265 = vmatprep.subr.bf16.mxu0 %v883
      %1266 = vmatpush1.bf16.msra.mxu0 %v882
      %1267 = vmatprep.subr.bf16.mxu0 %v885
      %1268 = vmatpush1.bf16.msra.mxu0 %v884
      %1269 = vmatprep.subr.bf16.mxu0 %v887
      %1270 = vmatpush1.bf16.msra.mxu0 %v886
      %1271 = vmatprep.subr.bf16.mxu0 %v889
      %1272 = vmatpush1.bf16.msra.mxu0 %v888
      %1273 = vmatprep.subr.bf16.mxu0 %v891
      %1274 = vmatpush1.bf16.msra.mxu0 %v890
      %1275 = vmatprep.subr.bf16.mxu0 %v893
      %1276 = vmatpush1.bf16.msra.mxu0 %v892
      %1277 = vmatprep.subr.bf16.mxu0 %v895
      %1278 = vmatpush1.bf16.msra.mxu0 %v894
      %1279 = vmatprep.subr.bf16.mxu0 %v897
      %1280 = vmatpush1.bf16.msra.mxu0 %v896
      %1281 = vmatprep.subr.bf16.mxu0 %v899
      %1282 = vmatpush1.bf16.msra.mxu0 %v898
      %1283 = vmatprep.mubr.bf16.mxu0 %v349
      %1284 = vmatmul.mubr.bf16.gmra.mrb[0].mxu0 %v348
      %v1285 = vpop.f32.mrb[0].mxu0
      %v1286 = vadd.f32 %v1173, %v1285
      %v1287 = vpop.f32.mrb[0].mxu0
      %v1288 = vadd.f32 %v1175, %v1287
      %v1289 = vpop.f32.mrb[0].mxu0
      %v1290 = vadd.f32 %v1177, %v1289
      %v1291 = vpop.f32.mrb[0].mxu0
      %v1292 = vadd.f32 %v1179, %v1291
      %1293 = vmatprep.mubr.bf16.mxu0 %v356
      %1294 = vmatmul.mubr.bf16.gmra.mrb[0].mxu0 %v355
      %v1295 = vpop.f32.mrb[0].mxu0
      %v1296 = vadd.f32 %v1183, %v1295
      %v1297 = vpop.f32.mrb[0].mxu0
      %v1298 = vadd.f32 %v1185, %v1297
      %v1299 = vpop.f32.mrb[0].mxu0
      %v1300 = vadd.f32 %v1187, %v1299
      %v1301 = vpop.f32.mrb[0].mxu0
      %v1302 = vadd.f32 %v1189, %v1301
      %1303 = vmatprep.mubr.bf16.mxu0 %v363
      %1304 = vmatmul.mubr.bf16.gmra.mrb[0].mxu0 %v362
      %v1305 = vpop.f32.mrb[0].mxu0
      %v1306 = vadd.f32 %v1193, %v1305
      %v1307 = vpop.f32.mrb[0].mxu0
      %v1308 = vadd.f32 %v1195, %v1307
      %v1309 = vpop.f32.mrb[0].mxu0
      %v1310 = vadd.f32 %v1197, %v1309
      %v1311 = vpop.f32.mrb[0].mxu0
      %v1312 = vadd.f32 %v1199, %v1311
      %1313 = vmatprep.mubr.bf16.mxu0 %v370
      %1314 = vmatmul.mubr.bf16.gmra.mrb[0].mxu0 %v369
      %v1315 = vpop.f32.mrb[0].mxu0
      %v1316 = vadd.f32 %v1203, %v1315
      %v1317 = vpop.f32.mrb[0].mxu0
      %v1318 = vadd.f32 %v1205, %v1317
      %v1319 = vpop.f32.mrb[0].mxu0
      %v1320 = vadd.f32 %v1207, %v1319
      %v1321 = vpop.f32.mrb[0].mxu0
      %v1322 = vadd.f32 %v1209, %v1321
      %1323 = vmatprep.mubr.bf16.mxu0 %v377
      %1324 = vmatmul.mubr.bf16.gmra.mrb[0].mxu0 %v376
      %v1325 = vpop.f32.mrb[0].mxu0
      %v1326 = vadd.f32 %v1213, %v1325
      %v1327 = vpop.f32.mrb[0].mxu0
      %v1328 = vadd.f32 %v1215, %v1327
      %v1329 = vpop.f32.mrb[0].mxu0
      %v1330 = vadd.f32 %v1217, %v1329
      %v1331 = vpop.f32.mrb[0].mxu0
      %v1332 = vadd.f32 %v1219, %v1331
      %1333 = vmatprep.mubr.bf16.mxu0 %v384
      %1334 = vmatmul.mubr.bf16.gmra.mrb[0].mxu0 %v383
      %v1335 = vpop.f32.mrb[0].mxu0
      %v1336 = vadd.f32 %v1223, %v1335
      %v1337 = vpop.f32.mrb[0].mxu0
      %v1338 = vadd.f32 %v1225, %v1337
      %v1339 = vpop.f32.mrb[0].mxu0
      %v1340 = vadd.f32 %v1227, %v1339
      %v1341 = vpop.f32.mrb[0].mxu0
      %v1342 = vadd.f32 %v1229, %v1341
      %1343 = vmatprep.mubr.bf16.mxu0 %v391
      %1344 = vmatmul.mubr.bf16.gmra.mrb[0].mxu0 %v390
      %v1345 = vpop.f32.mrb[0].mxu0
      %v1346 = vadd.f32 %v1233, %v1345
      %v1347 = vpop.f32.mrb[0].mxu0
      %v1348 = vadd.f32 %v1235, %v1347
      %v1349 = vpop.f32.mrb[0].mxu0
      %v1350 = vadd.f32 %v1237, %v1349
      %v1351 = vpop.f32.mrb[0].mxu0
      %v1352 = vadd.f32 %v1239, %v1351
      %1353 = vmatprep.mubr.bf16.mxu0 %v398
      %1354 = vmatmul.mubr.bf16.gmra.mrb[0].mxu0 %v397
      %v1355 = vpop.f32.mrb[0].mxu0
      %v1356 = vadd.f32 %v1243, %v1355
      %v1357 = vpop.f32.mrb[0].mxu0
      %v1358 = vadd.f32 %v1245, %v1357
      %v1359 = vpop.f32.mrb[0].mxu0
      %v1360 = vadd.f32 %v1247, %v1359
      %v1361 = vpop.f32.mrb[0].mxu0
      %v1362 = vadd.f32 %v1249, %v1361
      %1363 = vdwg.mxu0
      %1364 = vmatprep.subr.bf16.mxu0 %v901
      %1365 = vmatpush1.bf16.msra.mxu0 %v900
      %1366 = vmatprep.subr.bf16.mxu0 0
      %1367 = vmatpush1.bf16.msra.mxu0 0
      %1368 = vmatprep.subr.bf16.mxu0 0
      %1369 = vmatpush1.bf16.msra.mxu0 0
      %1370 = vmatprep.subr.bf16.mxu0 0
      %1371 = vmatpush1.bf16.msra.mxu0 0
      %1372 = vmatprep.subr.bf16.mxu0 0
      %1373 = vmatpush1.bf16.msra.mxu0 0
      %1374 = vmatprep.subr.bf16.mxu0 0
      %1375 = vmatpush1.bf16.msra.mxu0 0
      %1376 = vmatprep.subr.bf16.mxu0 0
      %1377 = vmatpush1.bf16.msra.mxu0 0
      %1378 = vmatprep.subr.bf16.mxu0 0
      %1379 = vmatpush1.bf16.msra.mxu0 0
      %1380 = vmatprep.subr.bf16.mxu0 0
      %1381 = vmatpush1.bf16.msra.mxu0 0
      %1382 = vmatprep.subr.bf16.mxu0 0
      %1383 = vmatpush1.bf16.msra.mxu0 0
      %1384 = vmatprep.subr.bf16.mxu0 0
      %1385 = vmatpush1.bf16.msra.mxu0 0
      %1386 = vmatprep.subr.bf16.mxu0 0
      %1387 = vmatpush1.bf16.msra.mxu0 0
      %1388 = vmatprep.subr.bf16.mxu0 0
      %1389 = vmatpush1.bf16.msra.mxu0 0
      %1390 = vmatprep.subr.bf16.mxu0 0
      %1391 = vmatpush1.bf16.msra.mxu0 0
      %1392 = vmatprep.subr.bf16.mxu0 0
      %1393 = vmatpush1.bf16.msra.mxu0 0
      %1394 = vmatprep.subr.bf16.mxu0 0
      %1395 = vmatpush1.bf16.msra.mxu0 0
      %1396 = vmatprep.mubr.bf16.mxu0 0
      %1397 = vmatmul.mubr.bf16.gmra.mrb[0].mxu0 %v1002
      %v1398 = vpop.f32.mrb[0].mxu0
      %v1399 = vadd.f32 %v1286, %v1398
      %v1400 = vpop.f32.mrb[0].mxu0
      %v1401 = vadd.f32 %v1288, %v1400
      %v1402 = vpop.f32.mrb[0].mxu0
      %v1403 = vadd.f32 %v1290, %v1402
      %v1404 = vpop.f32.mrb[0].mxu0
      %v1405 = vadd.f32 %v1292, %v1404
      %1406 = vmatprep.mubr.bf16.mxu0 0
      %1407 = vmatmul.mubr.bf16.gmra.mrb[0].mxu0 %v1005
      %v1408 = vpop.f32.mrb[0].mxu0
      %v1409 = vadd.f32 %v1296, %v1408
      %v1410 = vpop.f32.mrb[0].mxu0
      %v1411 = vadd.f32 %v1298, %v1410
      %v1412 = vpop.f32.mrb[0].mxu0
      %v1413 = vadd.f32 %v1300, %v1412
      %v1414 = vpop.f32.mrb[0].mxu0
      %v1415 = vadd.f32 %v1302, %v1414
      %1416 = vmatprep.mubr.bf16.mxu0 0
      %1417 = vmatmul.mubr.bf16.gmra.mrb[0].mxu0 %v1008
      %v1418 = vpop.f32.mrb[0].mxu0
      %v1419 = vadd.f32 %v1306, %v1418
      %v1420 = vpop.f32.mrb[0].mxu0
      %v1421 = vadd.f32 %v1308, %v1420
      %v1422 = vpop.f32.mrb[0].mxu0
      %v1423 = vadd.f32 %v1310, %v1422
      %v1424 = vpop.f32.mrb[0].mxu0
      %v1425 = vadd.f32 %v1312, %v1424
      %1426 = vmatprep.mubr.bf16.mxu0 0
      %1427 = vmatmul.mubr.bf16.gmra.mrb[0].mxu0 %v1011
      %v1428 = vpop.f32.mrb[0].mxu0
      %v1429 = vadd.f32 %v1316, %v1428
      %v1430 = vpop.f32.mrb[0].mxu0
      %v1431 = vadd.f32 %v1318, %v1430
      %v1432 = vpop.f32.mrb[0].mxu0
      %v1433 = vadd.f32 %v1320, %v1432
      %v1434 = vpop.f32.mrb[0].mxu0
      %v1435 = vadd.f32 %v1322, %v1434
      %1436 = vmatprep.mubr.bf16.mxu0 0
      %1437 = vmatmul.mubr.bf16.gmra.mrb[0].mxu0 %v1014
      %v1438 = vpop.f32.mrb[0].mxu0
      %v1439 = vadd.f32 %v1326, %v1438
      %v1440 = vpop.f32.mrb[0].mxu0
      %v1441 = vadd.f32 %v1328, %v1440
      %v1442 = vpop.f32.mrb[0].mxu0
      %v1443 = vadd.f32 %v1330, %v1442
      %v1444 = vpop.f32.mrb[0].mxu0
      %v1445 = vadd.f32 %v1332, %v1444
      %1446 = vmatprep.mubr.bf16.mxu0 0
      %1447 = vmatmul.mubr.bf16.gmra.mrb[0].mxu0 %v1017
      %v1448 = vpop.f32.mrb[0].mxu0
      %v1449 = vadd.f32 %v1336, %v1448
      %v1450 = vpop.f32.mrb[0].mxu0
      %v1451 = vadd.f32 %v1338, %v1450
      %v1452 = vpop.f32.mrb[0].mxu0
      %v1453 = vadd.f32 %v1340, %v1452
      %v1454 = vpop.f32.mrb[0].mxu0
      %v1455 = vadd.f32 %v1342, %v1454
      %1456 = vmatprep.mubr.bf16.mxu0 0
      %1457 = vmatmul.mubr.bf16.gmra.mrb[0].mxu0 %v1020
      %v1458 = vpop.f32.mrb[0].mxu0
      %v1459 = vadd.f32 %v1346, %v1458
      %v1460 = vpop.f32.mrb[0].mxu0
      %v1461 = vadd.f32 %v1348, %v1460
      %v1462 = vpop.f32.mrb[0].mxu0
      %v1463 = vadd.f32 %v1350, %v1462
      %v1464 = vpop.f32.mrb[0].mxu0
      %v1465 = vadd.f32 %v1352, %v1464
      %1466 = vmatprep.mubr.bf16.mxu0 0
      %1467 = vmatmul.mubr.bf16.gmra.mrb[0].mxu0 %v1023
      %v1468 = vpop.f32.mrb[0].mxu0
      %v1469 = vadd.f32 %v1356, %v1468
      %v1470 = vpop.f32.mrb[0].mxu0
      %v1471 = vadd.f32 %v1358, %v1470
      %v1472 = vpop.f32.mrb[0].mxu0
      %v1473 = vadd.f32 %v1360, %v1472
      %v1474 = vpop.f32.mrb[0].mxu0
      %v1475 = vadd.f32 %v1362, %v1474
      %1476 = vdwg.mxu0
      %v1477 = vmul.f32 %v1399, 0.5
      %v1478 = vmul.f32 %v1401, 0.5
      %v1479 = vmul.f32 %v1403, 0.5
      %v1480 = vmul.f32 %v1405, 0.5
      %v1481 = vmul.f32 %v1409, 0.5
      %v1482 = vmul.f32 %v1411, 0.5
      %v1483 = vmul.f32 %v1413, 0.5
      %v1484 = vmul.f32 %v1415, 0.5
      %v1485 = vmul.f32 %v1419, 0.5
      %v1486 = vmul.f32 %v1421, 0.5
      %v1487 = vmul.f32 %v1423, 0.5
      %v1488 = vmul.f32 %v1425, 0.5
      %v1489 = vmul.f32 %v1429, 0.5
      %v1490 = vmul.f32 %v1431, 0.5
      %v1491 = vmul.f32 %v1433, 0.5
      %v1492 = vmul.f32 %v1435, 0.5
      %v1493 = vmul.f32 %v1439, 0.5
      %v1494 = vmul.f32 %v1441, 0.5
      %v1495 = vmul.f32 %v1443, 0.5
      %v1496 = vmul.f32 %v1445, 0.5
      %v1497 = vmul.f32 %v1449, 0.5
      %v1498 = vmul.f32 %v1451, 0.5
      %v1499 = vmul.f32 %v1453, 0.5
      %v1500 = vmul.f32 %v1455, 0.5
      %v1501 = vmul.f32 %v1459, 0.5
      %v1502 = vmul.f32 %v1461, 0.5
      %v1503 = vmul.f32 %v1463, 0.5
      %v1504 = vmul.f32 %v1465, 0.5
      %v1505 = vmul.f32 %v1469, 0.5
      %v1506 = vmul.f32 %v1471, 0.5
      %v1507 = vmul.f32 %v1473, 0.5
      %v1508 = vmul.f32 %v1475, 0.5
      %v1509 = vtanh.pop %v1477
      %v1510 = vtanh.pop %v1478
      %v1511 = vtanh.pop %v1479
      %v1512 = vtanh.pop %v1480
      %v1513 = vtanh.pop %v1481
      %v1514 = vtanh.pop %v1482
      %v1515 = vtanh.pop %v1483
      %v1516 = vtanh.pop %v1484
      %v1517 = vtanh.pop %v1485
      %v1518 = vtanh.pop %v1486
      %v1519 = vtanh.pop %v1487
      %v1520 = vtanh.pop %v1488
      %v1521 = vtanh.pop %v1489
      %v1522 = vtanh.pop %v1490
      %v1523 = vtanh.pop %v1491
      %v1524 = vtanh.pop %v1492
      %v1525 = vtanh.pop %v1493
      %v1526 = vtanh.pop %v1494
      %v1527 = vtanh.pop %v1495
      %v1528 = vtanh.pop %v1496
      %v1529 = vtanh.pop %v1497
      %v1530 = vtanh.pop %v1498
      %v1531 = vtanh.pop %v1499
      %v1532 = vtanh.pop %v1500
      %v1533 = vtanh.pop %v1501
      %v1534 = vtanh.pop %v1502
      %v1535 = vtanh.pop %v1503
      %v1536 = vtanh.pop %v1504
      %v1537 = vtanh.pop %v1505
      %v1538 = vtanh.pop %v1506
      %v1539 = vtanh.pop %v1507
      %v1540 = vtanh.pop %v1508
      %v1541 = vmul.f32 %v1509, 0.5
      %v1542 = vmul.f32 %v1510, 0.5
      %v1543 = vmul.f32 %v1511, 0.5
      %v1544 = vmul.f32 %v1512, 0.5
      %v1545 = vmul.f32 %v1513, 0.5
      %v1546 = vmul.f32 %v1514, 0.5
      %v1547 = vmul.f32 %v1515, 0.5
      %v1548 = vmul.f32 %v1516, 0.5
      %v1549 = vmul.f32 %v1517, 0.5
      %v1550 = vmul.f32 %v1518, 0.5
      %v1551 = vmul.f32 %v1519, 0.5
      %v1552 = vmul.f32 %v1520, 0.5
      %v1553 = vmul.f32 %v1521, 0.5
      %v1554 = vmul.f32 %v1522, 0.5
      %v1555 = vmul.f32 %v1523, 0.5
      %v1556 = vmul.f32 %v1524, 0.5
      %v1557 = vmul.f32 %v1525, 0.5
      %v1558 = vmul.f32 %v1526, 0.5
      %v1559 = vmul.f32 %v1527, 0.5
      %v1560 = vmul.f32 %v1528, 0.5
      %v1561 = vmul.f32 %v1529, 0.5
      %v1562 = vmul.f32 %v1530, 0.5
      %v1563 = vmul.f32 %v1531, 0.5
      %v1564 = vmul.f32 %v1532, 0.5
      %v1565 = vmul.f32 %v1533, 0.5
      %v1566 = vmul.f32 %v1534, 0.5
      %v1567 = vmul.f32 %v1535, 0.5
      %v1568 = vmul.f32 %v1536, 0.5
      %v1569 = vmul.f32 %v1537, 0.5
      %v1570 = vmul.f32 %v1538, 0.5
      %v1571 = vmul.f32 %v1539, 0.5
      %v1572 = vmul.f32 %v1540, 0.5
      %v1573 = vadd.f32 %v1541, 0.5
      %v1574 = vadd.f32 %v1542, 0.5
      %v1575 = vadd.f32 %v1543, 0.5
      %v1576 = vadd.f32 %v1544, 0.5
      %v1577 = vadd.f32 %v1545, 0.5
      %v1578 = vadd.f32 %v1546, 0.5
      %v1579 = vadd.f32 %v1547, 0.5
      %v1580 = vadd.f32 %v1548, 0.5
      %v1581 = vadd.f32 %v1549, 0.5
      %v1582 = vadd.f32 %v1550, 0.5
      %v1583 = vadd.f32 %v1551, 0.5
      %v1584 = vadd.f32 %v1552, 0.5
      %v1585 = vadd.f32 %v1553, 0.5
      %v1586 = vadd.f32 %v1554, 0.5
      %v1587 = vadd.f32 %v1555, 0.5
      %v1588 = vadd.f32 %v1556, 0.5
      %v1589 = vadd.f32 %v1557, 0.5
      %v1590 = vadd.f32 %v1558, 0.5
      %v1591 = vadd.f32 %v1559, 0.5
      %v1592 = vadd.f32 %v1560, 0.5
      %v1593 = vadd.f32 %v1561, 0.5
      %v1594 = vadd.f32 %v1562, 0.5
      %v1595 = vadd.f32 %v1563, 0.5
      %v1596 = vadd.f32 %v1564, 0.5
      %v1597 = vadd.f32 %v1565, 0.5
      %v1598 = vadd.f32 %v1566, 0.5
      %v1599 = vadd.f32 %v1567, 0.5
      %v1600 = vadd.f32 %v1568, 0.5
      %v1601 = vadd.f32 %v1569, 0.5
      %v1602 = vadd.f32 %v1570, 0.5
      %v1603 = vadd.f32 %v1571, 0.5
      %v1604 = vadd.f32 %v1572, 0.5
      %v1605 = vpack.c.bf16 %v1575, %v1573
      %v1606 = vpack.c.bf16 %v1576, %v1574
      %v1607 = vpack.c.bf16 %v1579, %v1577
      %v1608 = vpack.c.bf16 %v1580, %v1578
      %v1609 = vpack.c.bf16 %v1583, %v1581
      %v1610 = vpack.c.bf16 %v1584, %v1582
      %v1611 = vpack.c.bf16 %v1587, %v1585
      %v1612 = vpack.c.bf16 %v1588, %v1586
      %v1613 = vpack.c.bf16 %v1591, %v1589
      %v1614 = vpack.c.bf16 %v1592, %v1590
      %v1615 = vpack.c.bf16 %v1595, %v1593
      %v1616 = vpack.c.bf16 %v1596, %v1594
      %v1617 = vpack.c.bf16 %v1599, %v1597
      %v1618 = vpack.c.bf16 %v1600, %v1598
      %v1619 = vpack.c.bf16 %v1603, %v1601
      %v1620 = vpack.c.bf16 %v1604, %v1602
      %v1621 = vld [vmem:[%s3] sm:$0xf]
      %v1622 = vld [vmem:[%s3 + $0x4] sm:$0xf]
      %v1623 = vld [vmem:[%s3 + $0x8] sm:$0xf]
      %v1624 = vld [vmem:[%s3 + $0xc] sm:$0xf]
      %v1625 = vld [vmem:[%s3 + $0x10] sm:$0xf]
      %v1626 = vld [vmem:[%s3 + $0x14] sm:$0xf]
      %v1627 = vld [vmem:[%s3 + $0x18] sm:$0xf]
      %v1628 = vld [vmem:[%s3 + $0x1c] sm:$0xf]
      %v1629 = vld [vmem:[%s3 + $0x20] sm:$0xf]
      %v1630 = vld [vmem:[%s3 + $0x24] sm:$0xf]
      %v1631 = vld [vmem:[%s3 + $0x28] sm:$0xf]
      %v1632 = vld [vmem:[%s3 + $0x2c] sm:$0xf]
      %v1633 = vld [vmem:[%s3 + $0x30] sm:$0xf]
      %v1634 = vld [vmem:[%s3 + $0x34] sm:$0xf]
      %v1635 = vld [vmem:[%s3 + $0x38] sm:$0xf]
      %v1636 = vld [vmem:[%s3 + $0x3c] sm:$0xf]
      %v1637 = vld [vmem:[%s3 + $0x40] sm:$0xf]
      %v1638 = vld [vmem:[%s3 + $0x44] sm:$0xf]
      %v1639 = vld [vmem:[%s3 + $0x48] sm:$0xf]
      %v1640 = vld [vmem:[%s3 + $0x4c] sm:$0xf]
      %v1641 = vld [vmem:[%s3 + $0x50] sm:$0xf]
      %v1642 = vld [vmem:[%s3 + $0x54] sm:$0xf]
      %v1643 = vld [vmem:[%s3 + $0x58] sm:$0xf]
      %v1644 = vld [vmem:[%s3 + $0x5c] sm:$0xf]
      %v1645 = vld [vmem:[%s3 + $0x60] sm:$0xf]
      %v1646 = vld [vmem:[%s3 + $0x64] sm:$0xf]
      %v1647 = vld [vmem:[%s3 + $0x68] sm:$0xf]
      %v1648 = vld [vmem:[%s3 + $0x6c] sm:$0xf]
      %v1649 = vld [vmem:[%s3 + $0x70] sm:$0xf]
      %v1650 = vld [vmem:[%s3 + $0x74] sm:$0xf]
      %v1651 = vld [vmem:[%s3 + $0x78] sm:$0xf]
      %v1652 = vld [vmem:[%s3 + $0x7c] sm:$0xf]
      %v1653 = vld [vmem:[%s4] sm:$0x1]
      %v1655 = vlaneseq
      %v1656 = vshrl.u32 %v1655, 7
      %v1657 = vsub.s32 0, %v1656
      %v1658 = vrot.slane %v1653, %v1657
      %v1692 = vunpack.c.l.b16 %v1621
      %v1693 = vunpack.c.l.b16 %v1622
      %v1694 = vunpack.c.l.b16 %v1623
      %v1695 = vunpack.c.l.b16 %v1624
      %v1696 = vunpack.c.l.b16 %v1625
      %v1697 = vunpack.c.l.b16 %v1626
      %v1698 = vunpack.c.l.b16 %v1627
      %v1699 = vunpack.c.l.b16 %v1628
      %v1700 = vunpack.c.l.b16 %v1629
      %v1701 = vunpack.c.l.b16 %v1630
      %v1702 = vunpack.c.l.b16 %v1631
      %v1703 = vunpack.c.l.b16 %v1632
      %v1704 = vunpack.c.l.b16 %v1633
      %v1705 = vunpack.c.l.b16 %v1634
      %v1706 = vunpack.c.l.b16 %v1635
      %v1707 = vunpack.c.l.b16 %v1636
      %v1708 = vunpack.c.l.b16 %v1637
      %v1709 = vunpack.c.l.b16 %v1638
      %v1710 = vunpack.c.l.b16 %v1639
      %v1711 = vunpack.c.l.b16 %v1640
      %v1712 = vunpack.c.l.b16 %v1641
      %v1713 = vunpack.c.l.b16 %v1642
      %v1714 = vunpack.c.l.b16 %v1643
      %v1715 = vunpack.c.l.b16 %v1644
      %v1716 = vunpack.c.l.b16 %v1645
      %v1717 = vunpack.c.l.b16 %v1646
      %v1718 = vunpack.c.l.b16 %v1647
      %v1719 = vunpack.c.l.b16 %v1648
      %v1720 = vunpack.c.l.b16 %v1649
      %v1721 = vunpack.c.l.b16 %v1650
      %v1722 = vunpack.c.l.b16 %v1651
      %v1723 = vunpack.c.l.b16 %v1652
      %v1724 = vpack.c.b16 %v1693, %v1692
      %v1725 = vpack.c.b16 %v1695, %v1694
      %v1726 = vpack.c.b16 %v1697, %v1696
      %v1727 = vpack.c.b16 %v1699, %v1698
      %v1728 = vpack.c.b16 %v1701, %v1700
      %v1729 = vpack.c.b16 %v1703, %v1702
      %v1730 = vpack.c.b16 %v1705, %v1704
      %v1731 = vpack.c.b16 %v1707, %v1706
      %v1732 = vpack.c.b16 %v1709, %v1708
      %v1733 = vpack.c.b16 %v1711, %v1710
      %v1734 = vpack.c.b16 %v1713, %v1712
      %v1735 = vpack.c.b16 %v1715, %v1714
      %v1736 = vpack.c.b16 %v1717, %v1716
      %v1737 = vpack.c.b16 %v1719, %v1718
      %v1738 = vpack.c.b16 %v1721, %v1720
      %v1739 = vpack.c.b16 %v1723, %v1722
      %1756 = vmatprep.subr.bf16.mxu0 0
      %1757 = vmatpush1.bf16.msra.mxu0 %v1724
      %1758 = vmatprep.subr.bf16.mxu0 0
      %1759 = vmatpush1.bf16.msra.mxu0 %v1725
      %1760 = vmatprep.subr.bf16.mxu0 0
      %1761 = vmatpush1.bf16.msra.mxu0 %v1726
      %1762 = vmatprep.subr.bf16.mxu0 0
      %1763 = vmatpush1.bf16.msra.mxu0 %v1727
      %1764 = vmatprep.subr.bf16.mxu0 0
      %1765 = vmatpush1.bf16.msra.mxu0 %v1728
      %1766 = vmatprep.subr.bf16.mxu0 0
      %1767 = vmatpush1.bf16.msra.mxu0 %v1729
      %1768 = vmatprep.subr.bf16.mxu0 0
      %1769 = vmatpush1.bf16.msra.mxu0 %v1730
      %1770 = vmatprep.subr.bf16.mxu0 0
      %1771 = vmatpush1.bf16.msra.mxu0 %v1731
      %1772 = vmatprep.subr.bf16.mxu0 0
      %1773 = vmatpush1.bf16.msra.mxu0 %v1732
      %1774 = vmatprep.subr.bf16.mxu0 0
      %1775 = vmatpush1.bf16.msra.mxu0 %v1733
      %1776 = vmatprep.subr.bf16.mxu0 0
      %1777 = vmatpush1.bf16.msra.mxu0 %v1734
      %1778 = vmatprep.subr.bf16.mxu0 0
      %1779 = vmatpush1.bf16.msra.mxu0 %v1735
      %1780 = vmatprep.subr.bf16.mxu0 0
      %1781 = vmatpush1.bf16.msra.mxu0 %v1736
      %1782 = vmatprep.subr.bf16.mxu0 0
      %1783 = vmatpush1.bf16.msra.mxu0 %v1737
      %1784 = vmatprep.subr.bf16.mxu0 0
      %1785 = vmatpush1.bf16.msra.mxu0 %v1738
      %1786 = vmatprep.subr.bf16.mxu0 0
      %1787 = vmatpush1.bf16.msra.mxu0 %v1739
      %1788 = vmatprep.mubr.bf16.mxu0 %v1606
      %1789 = vmatmul.mubr.bf16.gmra.mrb[0].mxu0 %v1605
      %v1790 = vpop.f32.mrb[0].mxu0
      %v1791 = vadd.f32 %v1658, %v1790
      %v1792 = vpop.f32.mrb[0].mxu0
      %v1793 = vpop.f32.mrb[0].mxu0
      %v1794 = vadd.f32 %v1658, %v1793
      %v1795 = vpop.f32.mrb[0].mxu0
      %1796 = vmatprep.mubr.bf16.mxu0 %v1608
      %1797 = vmatmul.mubr.bf16.gmra.mrb[0].mxu0 %v1607
      %v1798 = vpop.f32.mrb[0].mxu0
      %v1799 = vadd.f32 %v1658, %v1798
      %v1800 = vpop.f32.mrb[0].mxu0
      %v1801 = vpop.f32.mrb[0].mxu0
      %v1802 = vadd.f32 %v1658, %v1801
      %v1803 = vpop.f32.mrb[0].mxu0
      %1804 = vmatprep.mubr.bf16.mxu0 %v1610
      %1805 = vmatmul.mubr.bf16.gmra.mrb[0].mxu0 %v1609
      %v1806 = vpop.f32.mrb[0].mxu0
      %v1807 = vadd.f32 %v1658, %v1806
      %v1808 = vpop.f32.mrb[0].mxu0
      %v1809 = vpop.f32.mrb[0].mxu0
      %v1810 = vadd.f32 %v1658, %v1809
      %v1811 = vpop.f32.mrb[0].mxu0
      %1812 = vmatprep.mubr.bf16.mxu0 %v1612
      %1813 = vmatmul.mubr.bf16.gmra.mrb[0].mxu0 %v1611
      %v1814 = vpop.f32.mrb[0].mxu0
      %v1815 = vadd.f32 %v1658, %v1814
      %v1816 = vpop.f32.mrb[0].mxu0
      %v1817 = vpop.f32.mrb[0].mxu0
      %v1818 = vadd.f32 %v1658, %v1817
      %v1819 = vpop.f32.mrb[0].mxu0
      %1820 = vmatprep.mubr.bf16.mxu0 %v1614
      %1821 = vmatmul.mubr.bf16.gmra.mrb[0].mxu0 %v1613
      %v1822 = vpop.f32.mrb[0].mxu0
      %v1823 = vadd.f32 %v1658, %v1822
      %v1824 = vpop.f32.mrb[0].mxu0
      %v1825 = vpop.f32.mrb[0].mxu0
      %v1826 = vadd.f32 %v1658, %v1825
      %v1827 = vpop.f32.mrb[0].mxu0
      %1828 = vmatprep.mubr.bf16.mxu0 %v1616
      %1829 = vmatmul.mubr.bf16.gmra.mrb[0].mxu0 %v1615
      %v1830 = vpop.f32.mrb[0].mxu0
      %v1831 = vadd.f32 %v1658, %v1830
      %v1832 = vpop.f32.mrb[0].mxu0
      %v1833 = vpop.f32.mrb[0].mxu0
      %v1834 = vadd.f32 %v1658, %v1833
      %v1835 = vpop.f32.mrb[0].mxu0
      %1836 = vmatprep.mubr.bf16.mxu0 %v1618
      %1837 = vmatmul.mubr.bf16.gmra.mrb[0].mxu0 %v1617
      %v1838 = vpop.f32.mrb[0].mxu0
      %v1839 = vadd.f32 %v1658, %v1838
      %v1840 = vpop.f32.mrb[0].mxu0
      %v1841 = vpop.f32.mrb[0].mxu0
      %v1842 = vadd.f32 %v1658, %v1841
      %v1843 = vpop.f32.mrb[0].mxu0
      %1844 = vmatprep.mubr.bf16.mxu0 %v1620
      %1845 = vmatmul.mubr.bf16.gmra.mrb[0].mxu0 %v1619
      %v1846 = vpop.f32.mrb[0].mxu0
      %v1847 = vadd.f32 %v1658, %v1846
      %v1848 = vpop.f32.mrb[0].mxu0
      %v1849 = vpop.f32.mrb[0].mxu0
      %v1850 = vadd.f32 %v1658, %v1849
      %v1851 = vpop.f32.mrb[0].mxu0
      %1852 = vdwg.mxu0
      %1853 = vmax.xlane.f32.xlu0 %v1791
      %v1854 = vpop.xlane.xlu0 %1853
      %1855 = vmax.xlane.f32.xlu0 %v1794
      %v1856 = vpop.xlane.xlu0 %1855
      %1857 = vmax.xlane.f32.xlu0 %v1799
      %v1858 = vpop.xlane.xlu0 %1857
      %1859 = vmax.xlane.f32.xlu0 %v1802
      %v1860 = vpop.xlane.xlu0 %1859
      %1861 = vmax.xlane.f32.xlu0 %v1807
      %v1862 = vpop.xlane.xlu0 %1861
      %1863 = vmax.xlane.f32.xlu0 %v1810
      %v1864 = vpop.xlane.xlu0 %1863
      %1865 = vmax.xlane.f32.xlu0 %v1815
      %v1866 = vpop.xlane.xlu0 %1865
      %1867 = vmax.xlane.f32.xlu0 %v1818
      %v1868 = vpop.xlane.xlu0 %1867
      %1869 = vmax.xlane.f32.xlu0 %v1823
      %v1870 = vpop.xlane.xlu0 %1869
      %1871 = vmax.xlane.f32.xlu0 %v1826
      %v1872 = vpop.xlane.xlu0 %1871
      %1873 = vmax.xlane.f32.xlu0 %v1831
      %v1874 = vpop.xlane.xlu0 %1873
      %1875 = vmax.xlane.f32.xlu0 %v1834
      %v1876 = vpop.xlane.xlu0 %1875
      %1877 = vmax.xlane.f32.xlu0 %v1839
      %v1878 = vpop.xlane.xlu0 %1877
      %1879 = vmax.xlane.f32.xlu0 %v1842
      %v1880 = vpop.xlane.xlu0 %1879
      %1881 = vmax.xlane.f32.xlu0 %v1847
      %v1882 = vpop.xlane.xlu0 %1881
      %1883 = vmax.xlane.f32.xlu0 %v1850
      %v1884 = vpop.xlane.xlu0 %1883
      %v1885 = vsub.f32 %v1791, %v1854
      %v1886 = vsub.f32 %v1794, %v1856
      %v1887 = vsub.f32 %v1799, %v1858
      %v1888 = vsub.f32 %v1802, %v1860
      %v1889 = vsub.f32 %v1807, %v1862
      %v1890 = vsub.f32 %v1810, %v1864
      %v1891 = vsub.f32 %v1815, %v1866
      %v1892 = vsub.f32 %v1818, %v1868
      %v1893 = vsub.f32 %v1823, %v1870
      %v1894 = vsub.f32 %v1826, %v1872
      %v1895 = vsub.f32 %v1831, %v1874
      %v1896 = vsub.f32 %v1834, %v1876
      %v1897 = vsub.f32 %v1839, %v1878
      %v1898 = vsub.f32 %v1842, %v1880
      %v1899 = vsub.f32 %v1847, %v1882
      %v1900 = vsub.f32 %v1850, %v1884
      %v1901 = vmul.f32 %v1885, 1.442695
      %v1902 = vpow.pop %v1901
      %v1903 = vmul.f32 %v1886, 1.442695
      %v1904 = vpow.pop %v1903
      %v1905 = vmul.f32 %v1887, 1.442695
      %v1906 = vpow.pop %v1905
      %v1907 = vmul.f32 %v1888, 1.442695
      %v1908 = vpow.pop %v1907
      %v1909 = vmul.f32 %v1889, 1.442695
      %v1910 = vpow.pop %v1909
      %v1911 = vmul.f32 %v1890, 1.442695
      %v1912 = vpow.pop %v1911
      %v1913 = vmul.f32 %v1891, 1.442695
      %v1914 = vpow.pop %v1913
      %v1915 = vmul.f32 %v1892, 1.442695
      %v1916 = vpow.pop %v1915
      %v1917 = vmul.f32 %v1893, 1.442695
      %v1918 = vpow.pop %v1917
      %v1919 = vmul.f32 %v1894, 1.442695
      %v1920 = vpow.pop %v1919
      %v1921 = vmul.f32 %v1895, 1.442695
      %v1922 = vpow.pop %v1921
      %v1923 = vmul.f32 %v1896, 1.442695
      %v1924 = vpow.pop %v1923
      %v1925 = vmul.f32 %v1897, 1.442695
      %v1926 = vpow.pop %v1925
      %v1927 = vmul.f32 %v1898, 1.442695
      %v1928 = vpow.pop %v1927
      %v1929 = vmul.f32 %v1899, 1.442695
      %v1930 = vpow.pop %v1929
      %v1931 = vmul.f32 %v1900, 1.442695
      %v1932 = vpow.pop %v1931
      %1933 = vadd.xlane.f32.xlu0 %v1902
      %v1934 = vpop.xlane.xlu0 %1933
      %1935 = vadd.xlane.f32.xlu0 %v1904
      %v1936 = vpop.xlane.xlu0 %1935
      %1937 = vadd.xlane.f32.xlu0 %v1906
      %v1938 = vpop.xlane.xlu0 %1937
      %1939 = vadd.xlane.f32.xlu0 %v1908
      %v1940 = vpop.xlane.xlu0 %1939
      %1941 = vadd.xlane.f32.xlu0 %v1910
      %v1942 = vpop.xlane.xlu0 %1941
      %1943 = vadd.xlane.f32.xlu0 %v1912
      %v1944 = vpop.xlane.xlu0 %1943
      %1945 = vadd.xlane.f32.xlu0 %v1914
      %v1946 = vpop.xlane.xlu0 %1945
      %1947 = vadd.xlane.f32.xlu0 %v1916
      %v1948 = vpop.xlane.xlu0 %1947
      %1949 = vadd.xlane.f32.xlu0 %v1918
      %v1950 = vpop.xlane.xlu0 %1949
      %1951 = vadd.xlane.f32.xlu0 %v1920
      %v1952 = vpop.xlane.xlu0 %1951
      %1953 = vadd.xlane.f32.xlu0 %v1922
      %v1954 = vpop.xlane.xlu0 %1953
      %1955 = vadd.xlane.f32.xlu0 %v1924
      %v1956 = vpop.xlane.xlu0 %1955
      %1957 = vadd.xlane.f32.xlu0 %v1926
      %v1958 = vpop.xlane.xlu0 %1957
      %1959 = vadd.xlane.f32.xlu0 %v1928
      %v1960 = vpop.xlane.xlu0 %1959
      %1961 = vadd.xlane.f32.xlu0 %v1930
      %v1962 = vpop.xlane.xlu0 %1961
      %1963 = vadd.xlane.f32.xlu0 %v1932
      %v1964 = vpop.xlane.xlu0 %1963
      %v1965 = vrcp.pop %v1934
      %v1966 = vrcp.pop %v1936
      %v1967 = vrcp.pop %v1938
      %v1968 = vrcp.pop %v1940
      %v1969 = vrcp.pop %v1942
      %v1970 = vrcp.pop %v1944
      %v1971 = vrcp.pop %v1946
      %v1972 = vrcp.pop %v1948
      %v1973 = vrcp.pop %v1950
      %v1974 = vrcp.pop %v1952
      %v1975 = vrcp.pop %v1954
      %v1976 = vrcp.pop %v1956
      %v1977 = vrcp.pop %v1958
      %v1978 = vrcp.pop %v1960
      %v1979 = vrcp.pop %v1962
      %v1980 = vrcp.pop %v1964
      %v1981 = vmul.f32 %v1902, %v1965
      %v1982 = vmul.f32 %v1904, %v1966
      %v1983 = vmul.f32 %v1906, %v1967
      %v1984 = vmul.f32 %v1908, %v1968
      %v1985 = vmul.f32 %v1910, %v1969
      %v1986 = vmul.f32 %v1912, %v1970
      %v1987 = vmul.f32 %v1914, %v1971
      %v1988 = vmul.f32 %v1916, %v1972
      %v1989 = vmul.f32 %v1918, %v1973
      %v1990 = vmul.f32 %v1920, %v1974
      %v1991 = vmul.f32 %v1922, %v1975
      %v1992 = vmul.f32 %v1924, %v1976
      %v1993 = vmul.f32 %v1926, %v1977
      %v1994 = vmul.f32 %v1928, %v1978
      %v1995 = vmul.f32 %v1930, %v1979
      %v1996 = vmul.f32 %v1932, %v1980
      %v1997 = vpack.c.bf16 %v1982, %v1981
      %v1998 = vpack.c.bf16 %v1984, %v1983
      %v1999 = vpack.c.bf16 %v1986, %v1985
      %v2000 = vpack.c.bf16 %v1988, %v1987
      %v2001 = vpack.c.bf16 %v1990, %v1989
      %v2002 = vpack.c.bf16 %v1992, %v1991
      %v2003 = vpack.c.bf16 %v1994, %v1993
      %v2004 = vpack.c.bf16 %v1996, %v1995
      %v2013 = vunpack.c.l.b16 %v1997
      %v2014 = vunpack.c.h.b16 %v1997
      %v2015 = vunpack.c.l.b16 %v1998
      %v2016 = vunpack.c.h.b16 %v1998
      %v2017 = vunpack.c.l.b16 %v1999
      %v2018 = vunpack.c.h.b16 %v1999
      %v2019 = vunpack.c.l.b16 %v2000
      %v2020 = vunpack.c.h.b16 %v2000
      %v2021 = vunpack.c.l.b16 %v2001
      %v2022 = vunpack.c.h.b16 %v2001
      %v2023 = vunpack.c.l.b16 %v2002
      %v2024 = vunpack.c.h.b16 %v2002
      %v2025 = vunpack.c.l.b16 %v2003
      %v2026 = vunpack.c.h.b16 %v2003
      %v2027 = vunpack.c.l.b16 %v2004
      %v2028 = vunpack.c.h.b16 %v2004
      %v2029 = vpack.c.b16 %v2013, %v2013
      %v2030 = vpack.c.b16 %v2014, %v2014
      %v2031 = vpack.c.b16 %v2015, %v2015
      %v2032 = vpack.c.b16 %v2016, %v2016
      %v2033 = vpack.c.b16 %v2017, %v2017
      %v2034 = vpack.c.b16 %v2018, %v2018
      %v2035 = vpack.c.b16 %v2019, %v2019
      %v2036 = vpack.c.b16 %v2020, %v2020
      %v2037 = vpack.c.b16 %v2021, %v2021
      %v2038 = vpack.c.b16 %v2022, %v2022
      %v2039 = vpack.c.b16 %v2023, %v2023
      %v2040 = vpack.c.b16 %v2024, %v2024
      %v2041 = vpack.c.b16 %v2025, %v2025
      %v2042 = vpack.c.b16 %v2026, %v2026
      %v2043 = vpack.c.b16 %v2027, %v2027
      %v2044 = vpack.c.b16 %v2028, %v2028
      %2061 = vst [vmem:[%s229] sm:$0xf] %v2029
      %2062 = vst [vmem:[%s229 + $0x4] sm:$0xf] %v2030
      %2063 = vst [vmem:[%s229 + $0x8] sm:$0xf] %v2031
      %2064 = vst [vmem:[%s229 + $0xc] sm:$0xf] %v2032
      %2065 = vst [vmem:[%s229 + $0x10] sm:$0xf] %v2033
      %2066 = vst [vmem:[%s229 + $0x14] sm:$0xf] %v2034
      %2067 = vst [vmem:[%s229 + $0x18] sm:$0xf] %v2035
      %2068 = vst [vmem:[%s229 + $0x1c] sm:$0xf] %v2036
      %2069 = vst [vmem:[%s229 + $0x20] sm:$0xf] %v2037
      %2070 = vst [vmem:[%s229 + $0x24] sm:$0xf] %v2038
      %2071 = vst [vmem:[%s229 + $0x28] sm:$0xf] %v2039
      %2072 = vst [vmem:[%s229 + $0x2c] sm:$0xf] %v2040
      %2073 = vst [vmem:[%s229 + $0x30] sm:$0xf] %v2041
      %2074 = vst [vmem:[%s229 + $0x34] sm:$0xf] %v2042
      %2075 = vst [vmem:[%s229 + $0x38] sm:$0xf] %v2043
      %2076 = vst [vmem:[%s229 + $0x3c] sm:$0xf] %v2044
      %s2077 = smul.u32 16, %s16
      %p2078 = scmp.lt.s32.totalorder %s2077, 63
      %s2079 = scalar_select %p2078, %s2077, 63
      %s2080 = smul.addr %s2079, 4
      %s2081 = scalar_lea.vmem %s5, %s2080
      // Predicated region
      $region41: #{network_forward.1} parent=39 // pred_check
        %p2082 = pneg %p144
      $region42: #{network_forward.1} parent=39 // pred_check_branch
        %2084 = sbr.rel (%p2082) target = $region44
      $region43: #{network_forward.1} parent=39 // pred_region
        %s2085 = smul.u32 16, %s16
      $region44: #{network_forward.1} parent=39 // pred_fallthru
        _
    $region40: #{network_forward.1} parent=5 // pred_fallthru
      _
    %p2086 = scmp.le.s32.totalorder 2, %s11
    // Predicated region
    $region45: #{network_forward.1} parent=5 // pred_check
      %p2087 = pneg %p2086
    $region46: #{network_forward.1} parent=5 // pred_check_branch
      %2089 = sbr.rel (%p2087) target = $region48
    $region47: #{network_forward.1} parent=5 // pred_region
      %s2090 = ssub.s32 %s11, 2
      // Predicated region
      $region49: #{network_forward.1} parent=47 // pred_check
        %p2091 = pneg %p150
      $region50: #{network_forward.1} parent=47 // pred_check_branch
        %2093 = sbr.rel (%p2091) target = $region52
      $region51: #{network_forward.1} parent=47 // pred_region
        %s2094 = smul.u32 16, %s17
        %p2095 = scmp.lt.s32.totalorder %s2094, 63
        %s2096 = scalar_select %p2095, %s2094, 63
        %s2097 = smul.addr %s2096, 4
        %s2098 = scalar_lea.vmem %s5, %s2097
      $region52: #{network_forward.1} parent=47 // pred_fallthru
        _
    $region48: #{network_forward.1} parent=5 // pred_fallthru
      _
  $region6: #{network_forward.1} parent=0 // loop_footer
    %s15 = sadd.s32 1, %s11
  $region7: #{network_forward.1} parent=0 // loop_footer_branch
    %10 = sbr.rel target = $region3
  $region8: #{network_forward.1} parent=0 // loop_exit
    _

</llo_original>
